<compile_context>
chip_gen: v6e
topology: v6e:2x2x1
jax: 0.10.0
libtpu: 0.0.40
codegen_flags: <defaults>
</compile_context>

<pallas_src>
import numpy as np
import jax
import jax.numpy as jnp
from jax import lax
from jax.experimental import pallas as pl
from jax.experimental.pallas import tpu as pltpu


def xzh_pingxing_forward(x_nchw, w_oihw, gamma, beta, padding=1):
    """ReLU(BN(Conv2d(x)))  with training-mode (batch-stat) BatchNorm semantics."""
    x = x_nchw.astype(jnp.float32)
    B, Cin, H, W = x.shape
    Cout, cin_w, KH, KW = w_oihw.shape
    assert cin_w == Cin and KH == KW and KH % 2 == 1 and 2 * padding == KH - 1, (
        "only stride=1 / dilation=1 / 'same' padding supported")

    HW = H * W
    N = B * HW                              # output columns (lane axis) = 512 here
    halo = padding * W + padding            # max |flat tap shift|
    margin = ((halo + 127) // 128) * 128    # lane-aligned halo -> aligned interior stores

    # ---- tiny parameter prep (O(Cout*Cin*K^2) / O(N); constant-folded / fused under jit) ----
    # Tap-major conv weights in bf16 so the MXU runs at its bf16 rate.
    w_taps = jnp.transpose(w_oihw.astype(jnp.bfloat16), (2, 3, 0, 1)).reshape(KH * KW, Cout, Cin)
    gb = jnp.stack([gamma.astype(jnp.float32), beta.astype(jnp.float32)], axis=1)   # (Cout, 2)

    # Per-tap validity masks over the flattened (b, h, w) column index: a lane shift of
    # the flattened image wraps across row / batch boundaries, and those columns must
    # read as the conv's zero padding.  Built with numpy at trace time.
    n_idx = np.arange(N)
    w_id = n_idx % W
    h_id = (n_idx // W) % H
    masks_np = np.ones((KH * KW, N), np.float32)
    for kh in range(KH):
        for kw in range(KW):
            dh, dw = kh - padding, kw - padding
            valid = ((h_id + dh >= 0) & (h_id + dh < H) &
                     (w_id + dw >= 0) & (w_id + dw < W))
            masks_np[kh * KW + kw] = valid.astype(np.float32)
    masks = jnp.asarray(masks_np)

    def kernel(x_ref, w_ref, m_ref, gb_ref, o_ref, ext_ref):
        # x_ref  : (B, Cin, HW)        f32   flattened NCHW input (free wrapper reshape)
        # w_ref  : (KH*KW, Cout, Cin)  bf16  tap-major conv weights
        # m_ref  : (KH*KW, N)          f32   per-tap validity masks
        # gb_ref : (Cout, 2)           f32   [:,0]=gamma, [:,1]=beta
        # o_ref  : (B, Cout, HW)       f32   lane axis HW = 2*128 -> unmasked stores
        # ext_ref: (Cin, margin+N+margin) bf16 scratch with a zero halo on both sides.

        # In-kernel "im2col": stage the images inside the zero halo; each tap is then
        # just a lane-shifted slice of this buffer.
        ext_ref[...] = jnp.zeros(ext_ref.shape, ext_ref.dtype)
        for b in range(B):
            ext_ref[:, margin + b * HW: margin + (b + 1) * HW] = (
                x_ref[b].astype(ext_ref.dtype))

        # Conv = sum over 9 taps of a small bf16 MXU GEMM over Cin, accumulated in f32.
        acc = jnp.zeros((Cout, N), jnp.float32)
        for kh in range(KH):
            for kw in range(KW):
                k = kh * KW + kw
                shift = (kh - padding) * W + (kw - padding)
                tap = ext_ref[:, margin + shift: margin + shift + N]      # (Cin, N) bf16
                prod = jnp.dot(w_ref[k], tap, preferred_element_type=jnp.float32)
                if shift != 0:                         # center tap needs no mask
                    prod = prod * m_ref[k:k + 1, :]
                acc = acc + prod

        # BatchNorm2d (training-mode batch stats) + affine + ReLU, all lane-dense f32.
        inv_n = 1.0 / float(N)
        mean = jnp.sum(acc, axis=1, keepdims=True) * inv_n                 # (Cout, 1)
        centered = acc - mean
        var = jnp.sum(centered * centered, axis=1, keepdims=True) * inv_n  # biased var
        scale = gb_ref[:, 0:1] * lax.rsqrt(var + 1e-5)
        beta_col = gb_ref[:, 1:2]
        res = jnp.maximum(centered * scale + beta_col, 0.0)

        # Output already in (B, Cout, HW): per-batch slices are 128-aligned, lane-dense.
        for b in range(B):
            o_ref[b] = res[:, b * HW: (b + 1) * HW]

    flops = 2 * Cout * Cin * KH * KW * N + 8 * Cout * N
    bytes_accessed = int(x.size) * 4 + int(w_taps.size) * 2 + int(masks.size) * 4 \
        + int(gb.size) * 4 + B * Cout * HW * 4

    out = pl.pallas_call(
        kernel,
        out_shape=jax.ShapeDtypeStruct((B, Cout, HW), jnp.float32),
        in_specs=[pl.BlockSpec(memory_space=pltpu.MemorySpace.VMEM)] * 4,
        out_specs=pl.BlockSpec(memory_space=pltpu.MemorySpace.VMEM),
        scratch_shapes=[pltpu.VMEM((Cin, margin + N + margin), jnp.bfloat16)],
        cost_estimate=pl.CostEstimate(flops=flops, transcendentals=Cout,
                                      bytes_accessed=bytes_accessed),
    )(x.reshape(B, Cin, HW), w_taps, masks, gb)

    # (B, Cout, HW) -> (B, Cout, H, W): contiguous, free reshape (no transpose).
    return out.reshape(B, Cout, H, W)


def reference_forward(x_nchw, w_oihw, gamma, beta):
    """Pure-JAX f32 reference matching PyTorch training-mode forward."""
    y = lax.conv_general_dilated(
        x_nchw.astype(jnp.float32), w_oihw.astype(jnp.float32),
        window_strides=(1, 1), padding=((1, 1), (1, 1)),
        dimension_numbers=('NCHW', 'OIHW', 'NCHW'))
    mean = jnp.mean(y, axis=(0, 2, 3), keepdims=True)
    var = jnp.mean((y - mean) ** 2, axis=(0, 2, 3), keepdims=True)
    yn = (y - mean) / jnp.sqrt(var + 1e-5)
    yn = yn * gamma.reshape(1, -1, 1, 1) + beta.reshape(1, -1, 1, 1)
    return jnp.maximum(yn, 0.0)


if __name__ == "__main__":
    # Small shapes consistent with the module: batch=2, in_channels=4, spatial=16.
    B, Cin, H, W = 2, 4, 16, 16
    Cout = Cin // 2
    KH = KW = 3

    key = jax.random.PRNGKey(0)
    kx, kw, kg, kb = jax.random.split(key, 4)

    x = jax.random.normal(kx, (B, Cin, H, W), dtype=jnp.float32)
    fan_in = Cin * KH * KW
    w = jax.random.normal(kw, (Cout, Cin, KH, KW), dtype=jnp.float32) / jnp.sqrt(fan_in)
    gamma = 1.0 + 0.1 * jax.random.normal(kg, (Cout,), dtype=jnp.float32)
    beta = 0.1 * jax.random.normal(kb, (Cout,), dtype=jnp.float32)

    fwd = jax.jit(xzh_pingxing_forward)
    out = jax.block_until_ready(fwd(x, w, gamma, beta))

    ref = jax.block_until_ready(reference_forward(x, w, gamma, beta))
    assert out.shape == (B, Cout, H, W), out.shape
    # bf16 MXU operands => looser tolerance vs the f32 reference (per review note).
    assert jnp.allclose(out, ref, atol=3e-2, rtol=3e-2), \
        float(jnp.max(jnp.abs(out - ref)))

    print("KERNEL_OK")
</pallas_src>

<mosaic_0001>
module attributes {stable_mosaic.version = 11 : i64} {
  func.func @kernel(%arg0: memref<2x4x256xf32, #tpu.memory_space<vmem>>, %arg1: memref<9x2x4xbf16, #tpu.memory_space<vmem>>, %arg2: memref<9x512xf32, #tpu.memory_space<vmem>>, %arg3: memref<2x2xf32, #tpu.memory_space<vmem>>, %arg4: memref<2x2x256xf32, #tpu.memory_space<vmem>>, %arg5: memref<4x768xbf16, #tpu.memory_space<vmem>>) attributes {dimension_semantics = [], scalar_prefetch = 0 : i64, scratch_operands = 1 : i64, tpu.core_type = #tpu.core_type<tc>} {
    %cst = arith.constant 0.000000e+00 : bf16
    %0 = vector.broadcast %cst : bf16 to vector<4x768xbf16>
    %c0 = arith.constant 0 : index
    %c0_0 = arith.constant 0 : index
    %1 = vector.load %arg5[%c0, %c0_0] : memref<4x768xbf16, #tpu.memory_space<vmem>>, vector<4x768xbf16>
    tpu.vector_store %arg5[%c0, %c0_0], %0 {strides = array<i32>} : memref<4x768xbf16, #tpu.memory_space<vmem>>, vector<4x768xbf16>,
    %c0_1 = arith.constant 0 : index
    %c0_2 = arith.constant 0 : index
    %c0_3 = arith.constant 0 : index
    %2 = vector.load %arg0[%c0_1, %c0_2, %c0_3] : memref<2x4x256xf32, #tpu.memory_space<vmem>>, vector<1x4x256xf32>
    %3 = vector.shape_cast %2 : vector<1x4x256xf32> to vector<4x256xf32>
    %4 = arith.truncf %3 : vector<4x256xf32> to vector<4x256xbf16>
    %c0_4 = arith.constant 0 : index
    %c128 = arith.constant 128 : index
    %5 = vector.load %arg5[%c0_4, %c128] : memref<4x768xbf16, #tpu.memory_space<vmem>>, vector<4x256xbf16>
    tpu.vector_store %arg5[%c0_4, %c128], %4 {strides = array<i32>} : memref<4x768xbf16, #tpu.memory_space<vmem>>, vector<4x256xbf16>,
    %c1 = arith.constant 1 : index
    %c0_5 = arith.constant 0 : index
    %c0_6 = arith.constant 0 : index
    %6 = vector.load %arg0[%c1, %c0_5, %c0_6] : memref<2x4x256xf32, #tpu.memory_space<vmem>>, vector<1x4x256xf32>
    %7 = vector.shape_cast %6 : vector<1x4x256xf32> to vector<4x256xf32>
    %8 = arith.truncf %7 : vector<4x256xf32> to vector<4x256xbf16>
    %c0_7 = arith.constant 0 : index
    %c384 = arith.constant 384 : index
    %9 = vector.load %arg5[%c0_7, %c384] : memref<4x768xbf16, #tpu.memory_space<vmem>>, vector<4x256xbf16>
    tpu.vector_store %arg5[%c0_7, %c384], %8 {strides = array<i32>} : memref<4x768xbf16, #tpu.memory_space<vmem>>, vector<4x256xbf16>,
    %cst_8 = arith.constant 0.000000e+00 : f32
    %10 = vector.broadcast %cst_8 : f32 to vector<2x512xf32>
    %c0_9 = arith.constant 0 : index
    %c111 = arith.constant 111 : index
    %11 = vector.load %arg5[%c0_9, %c111] : memref<4x768xbf16, #tpu.memory_space<vmem>>, vector<4x512xbf16>
    %c0_10 = arith.constant 0 : index
    %c0_11 = arith.constant 0 : index
    %c0_12 = arith.constant 0 : index
    %12 = vector.load %arg1[%c0_10, %c0_11, %c0_12] : memref<9x2x4xbf16, #tpu.memory_space<vmem>>, vector<1x2x4xbf16>
    %13 = vector.shape_cast %12 : vector<1x2x4xbf16> to vector<2x4xbf16>
    %cst_13 = arith.constant dense<0.000000e+00> : vector<2x512xf32>
    %14 = tpu.matmul %13, %11, %cst_13 {dimension_numbers = #tpu.dot_dimension_numbers<[1], [0], [0], [1], [0, 0, 1, 1], [], []>} : vector<2x4xbf16>, vector<4x512xbf16>, vector<2x512xf32> -> vector<2x512xf32>
    %c0_14 = arith.constant 0 : index
    %c0_15 = arith.constant 0 : index
    %15 = vector.load %arg2[%c0_14, %c0_15] : memref<9x512xf32, #tpu.memory_space<vmem>>, vector<1x512xf32>
    %16 = vector.broadcast %15 : vector<1x512xf32> to vector<2x512xf32>
    %17 = arith.mulf %14, %16 : vector<2x512xf32>
    %18 = arith.addf %10, %17 : vector<2x512xf32>
    %c0_16 = arith.constant 0 : index
    %c112 = arith.constant 112 : index
    %19 = vector.load %arg5[%c0_16, %c112] : memref<4x768xbf16, #tpu.memory_space<vmem>>, vector<4x512xbf16>
    %c1_17 = arith.constant 1 : index
    %c0_18 = arith.constant 0 : index
    %c0_19 = arith.constant 0 : index
    %20 = vector.load %arg1[%c1_17, %c0_18, %c0_19] : memref<9x2x4xbf16, #tpu.memory_space<vmem>>, vector<1x2x4xbf16>
    %21 = vector.shape_cast %20 : vector<1x2x4xbf16> to vector<2x4xbf16>
    %cst_20 = arith.constant dense<0.000000e+00> : vector<2x512xf32>
    %22 = tpu.matmul %21, %19, %cst_20 {dimension_numbers = #tpu.dot_dimension_numbers<[1], [0], [0], [1], [0, 0, 1, 1], [], []>} : vector<2x4xbf16>, vector<4x512xbf16>, vector<2x512xf32> -> vector<2x512xf32>
    %c1_21 = arith.constant 1 : index
    %c0_22 = arith.constant 0 : index
    %23 = vector.load %arg2[%c1_21, %c0_22] : memref<9x512xf32, #tpu.memory_space<vmem>>, vector<1x512xf32>
    %24 = vector.broadcast %23 : vector<1x512xf32> to vector<2x512xf32>
    %25 = arith.mulf %22, %24 : vector<2x512xf32>
    %26 = arith.addf %18, %25 : vector<2x512xf32>
    %c0_23 = arith.constant 0 : index
    %c113 = arith.constant 113 : index
    %27 = vector.load %arg5[%c0_23, %c113] : memref<4x768xbf16, #tpu.memory_space<vmem>>, vector<4x512xbf16>
    %c2 = arith.constant 2 : index
    %c0_24 = arith.constant 0 : index
    %c0_25 = arith.constant 0 : index
    %28 = vector.load %arg1[%c2, %c0_24, %c0_25] : memref<9x2x4xbf16, #tpu.memory_space<vmem>>, vector<1x2x4xbf16>
    %29 = vector.shape_cast %28 : vector<1x2x4xbf16> to vector<2x4xbf16>
    %cst_26 = arith.constant dense<0.000000e+00> : vector<2x512xf32>
    %30 = tpu.matmul %29, %27, %cst_26 {dimension_numbers = #tpu.dot_dimension_numbers<[1], [0], [0], [1], [0, 0, 1, 1], [], []>} : vector<2x4xbf16>, vector<4x512xbf16>, vector<2x512xf32> -> vector<2x512xf32>
    %c2_27 = arith.constant 2 : index
    %c0_28 = arith.constant 0 : index
    %31 = vector.load %arg2[%c2_27, %c0_28] : memref<9x512xf32, #tpu.memory_space<vmem>>, vector<1x512xf32>
    %32 = vector.broadcast %31 : vector<1x512xf32> to vector<2x512xf32>
    %33 = arith.mulf %30, %32 : vector<2x512xf32>
    %34 = arith.addf %26, %33 : vector<2x512xf32>
    %c0_29 = arith.constant 0 : index
    %c127 = arith.constant 127 : index
    %35 = vector.load %arg5[%c0_29, %c127] : memref<4x768xbf16, #tpu.memory_space<vmem>>, vector<4x512xbf16>
    %c3 = arith.constant 3 : index
    %c0_30 = arith.constant 0 : index
    %c0_31 = arith.constant 0 : index
    %36 = vector.load %arg1[%c3, %c0_30, %c0_31] : memref<9x2x4xbf16, #tpu.memory_space<vmem>>, vector<1x2x4xbf16>
    %37 = vector.shape_cast %36 : vector<1x2x4xbf16> to vector<2x4xbf16>
    %cst_32 = arith.constant dense<0.000000e+00> : vector<2x512xf32>
    %38 = tpu.matmul %37, %35, %cst_32 {dimension_numbers = #tpu.dot_dimension_numbers<[1], [0], [0], [1], [0, 0, 1, 1], [], []>} : vector<2x4xbf16>, vector<4x512xbf16>, vector<2x512xf32> -> vector<2x512xf32>
    %c3_33 = arith.constant 3 : index
    %c0_34 = arith.constant 0 : index
    %39 = vector.load %arg2[%c3_33, %c0_34] : memref<9x512xf32, #tpu.memory_space<vmem>>, vector<1x512xf32>
    %40 = vector.broadcast %39 : vector<1x512xf32> to vector<2x512xf32>
    %41 = arith.mulf %38, %40 : vector<2x512xf32>
    %42 = arith.addf %34, %41 : vector<2x512xf32>
    %c0_35 = arith.constant 0 : index
    %c128_36 = arith.constant 128 : index
    %43 = vector.load %arg5[%c0_35, %c128_36] : memref<4x768xbf16, #tpu.memory_space<vmem>>, vector<4x512xbf16>
    %c4 = arith.constant 4 : index
    %c0_37 = arith.constant 0 : index
    %c0_38 = arith.constant 0 : index
    %44 = vector.load %arg1[%c4, %c0_37, %c0_38] : memref<9x2x4xbf16, #tpu.memory_space<vmem>>, vector<1x2x4xbf16>
    %45 = vector.shape_cast %44 : vector<1x2x4xbf16> to vector<2x4xbf16>
    %cst_39 = arith.constant dense<0.000000e+00> : vector<2x512xf32>
    %46 = tpu.matmul %45, %43, %cst_39 {dimension_numbers = #tpu.dot_dimension_numbers<[1], [0], [0], [1], [0, 0, 1, 1], [], []>} : vector<2x4xbf16>, vector<4x512xbf16>, vector<2x512xf32> -> vector<2x512xf32>
    %47 = arith.addf %42, %46 : vector<2x512xf32>
    %c0_40 = arith.constant 0 : index
    %c129 = arith.constant 129 : index
    %48 = vector.load %arg5[%c0_40, %c129] : memref<4x768xbf16, #tpu.memory_space<vmem>>, vector<4x512xbf16>
    %c5 = arith.constant 5 : index
    %c0_41 = arith.constant 0 : index
    %c0_42 = arith.constant 0 : index
    %49 = vector.load %arg1[%c5, %c0_41, %c0_42] : memref<9x2x4xbf16, #tpu.memory_space<vmem>>, vector<1x2x4xbf16>
    %50 = vector.shape_cast %49 : vector<1x2x4xbf16> to vector<2x4xbf16>
    %cst_43 = arith.constant dense<0.000000e+00> : vector<2x512xf32>
    %51 = tpu.matmul %50, %48, %cst_43 {dimension_numbers = #tpu.dot_dimension_numbers<[1], [0], [0], [1], [0, 0, 1, 1], [], []>} : vector<2x4xbf16>, vector<4x512xbf16>, vector<2x512xf32> -> vector<2x512xf32>
    %c5_44 = arith.constant 5 : index
    %c0_45 = arith.constant 0 : index
    %52 = vector.load %arg2[%c5_44, %c0_45] : memref<9x512xf32, #tpu.memory_space<vmem>>, vector<1x512xf32>
    %53 = vector.broadcast %52 : vector<1x512xf32> to vector<2x512xf32>
    %54 = arith.mulf %51, %53 : vector<2x512xf32>
    %55 = arith.addf %47, %54 : vector<2x512xf32>
    %c0_46 = arith.constant 0 : index
    %c143 = arith.constant 143 : index
    %56 = vector.load %arg5[%c0_46, %c143] : memref<4x768xbf16, #tpu.memory_space<vmem>>, vector<4x512xbf16>
    %c6 = arith.constant 6 : index
    %c0_47 = arith.constant 0 : index
    %c0_48 = arith.constant 0 : index
    %57 = vector.load %arg1[%c6, %c0_47, %c0_48] : memref<9x2x4xbf16, #tpu.memory_space<vmem>>, vector<1x2x4xbf16>
    %58 = vector.shape_cast %57 : vector<1x2x4xbf16> to vector<2x4xbf16>
    %cst_49 = arith.constant dense<0.000000e+00> : vector<2x512xf32>
    %59 = tpu.matmul %58, %56, %cst_49 {dimension_numbers = #tpu.dot_dimension_numbers<[1], [0], [0], [1], [0, 0, 1, 1], [], []>} : vector<2x4xbf16>, vector<4x512xbf16>, vector<2x512xf32> -> vector<2x512xf32>
    %c6_50 = arith.constant 6 : index
    %c0_51 = arith.constant 0 : index
    %60 = vector.load %arg2[%c6_50, %c0_51] : memref<9x512xf32, #tpu.memory_space<vmem>>, vector<1x512xf32>
    %61 = vector.broadcast %60 : vector<1x512xf32> to vector<2x512xf32>
    %62 = arith.mulf %59, %61 : vector<2x512xf32>
    %63 = arith.addf %55, %62 : vector<2x512xf32>
    %c0_52 = arith.constant 0 : index
    %c144 = arith.constant 144 : index
    %64 = vector.load %arg5[%c0_52, %c144] : memref<4x768xbf16, #tpu.memory_space<vmem>>, vector<4x512xbf16>
    %c7 = arith.constant 7 : index
    %c0_53 = arith.constant 0 : index
    %c0_54 = arith.constant 0 : index
    %65 = vector.load %arg1[%c7, %c0_53, %c0_54] : memref<9x2x4xbf16, #tpu.memory_space<vmem>>, vector<1x2x4xbf16>
    %66 = vector.shape_cast %65 : vector<1x2x4xbf16> to vector<2x4xbf16>
    %cst_55 = arith.constant dense<0.000000e+00> : vector<2x512xf32>
    %67 = tpu.matmul %66, %64, %cst_55 {dimension_numbers = #tpu.dot_dimension_numbers<[1], [0], [0], [1], [0, 0, 1, 1], [], []>} : vector<2x4xbf16>, vector<4x512xbf16>, vector<2x512xf32> -> vector<2x512xf32>
    %c7_56 = arith.constant 7 : index
    %c0_57 = arith.constant 0 : index
    %68 = vector.load %arg2[%c7_56, %c0_57] : memref<9x512xf32, #tpu.memory_space<vmem>>, vector<1x512xf32>
    %69 = vector.broadcast %68 : vector<1x512xf32> to vector<2x512xf32>
    %70 = arith.mulf %67, %69 : vector<2x512xf32>
    %71 = arith.addf %63, %70 : vector<2x512xf32>
    %c0_58 = arith.constant 0 : index
    %c145 = arith.constant 145 : index
    %72 = vector.load %arg5[%c0_58, %c145] : memref<4x768xbf16, #tpu.memory_space<vmem>>, vector<4x512xbf16>
    %c8 = arith.constant 8 : index
    %c0_59 = arith.constant 0 : index
    %c0_60 = arith.constant 0 : index
    %73 = vector.load %arg1[%c8, %c0_59, %c0_60] : memref<9x2x4xbf16, #tpu.memory_space<vmem>>, vector<1x2x4xbf16>
    %74 = vector.shape_cast %73 : vector<1x2x4xbf16> to vector<2x4xbf16>
    %cst_61 = arith.constant dense<0.000000e+00> : vector<2x512xf32>
    %75 = tpu.matmul %74, %72, %cst_61 {dimension_numbers = #tpu.dot_dimension_numbers<[1], [0], [0], [1], [0, 0, 1, 1], [], []>} : vector<2x4xbf16>, vector<4x512xbf16>, vector<2x512xf32> -> vector<2x512xf32>
    %c8_62 = arith.constant 8 : index
    %c0_63 = arith.constant 0 : index
    %76 = vector.load %arg2[%c8_62, %c0_63] : memref<9x512xf32, #tpu.memory_space<vmem>>, vector<1x512xf32>
    %77 = vector.broadcast %76 : vector<1x512xf32> to vector<2x512xf32>
    %78 = arith.mulf %75, %77 : vector<2x512xf32>
    %79 = arith.addf %71, %78 : vector<2x512xf32>
    %cst_64 = arith.constant dense<0.000000e+00> : vector<2xf32>
    %80 = vector.multi_reduction <add>, %79, %cst_64 [1] : vector<2x512xf32> to vector<2xf32>
    %81 = vector.shape_cast %80 : vector<2xf32> to vector<2x1xf32>
    %cst_65 = arith.constant 0.001953125 : f32
    %82 = vector.broadcast %cst_65 : f32 to vector<2x1xf32>
    %83 = arith.mulf %81, %82 : vector<2x1xf32>
    %84 = vector.broadcast %83 : vector<2x1xf32> to vector<2x512xf32>
    %85 = arith.subf %79, %84 : vector<2x512xf32>
    %86 = arith.mulf %85, %85 : vector<2x512xf32>
    %cst_66 = arith.constant dense<0.000000e+00> : vector<2xf32>
    %87 = vector.multi_reduction <add>, %86, %cst_66 [1] : vector<2x512xf32> to vector<2xf32>
    %88 = vector.shape_cast %87 : vector<2xf32> to vector<2x1xf32>
    %cst_67 = arith.constant 0.001953125 : f32
    %89 = vector.broadcast %cst_67 : f32 to vector<2x1xf32>
    %90 = arith.mulf %88, %89 : vector<2x1xf32>
    %c0_68 = arith.constant 0 : index
    %c0_69 = arith.constant 0 : index
    %91 = vector.load %arg3[%c0_68, %c0_69] : memref<2x2xf32, #tpu.memory_space<vmem>>, vector<2x1xf32>
    %cst_70 = arith.constant 9.99999974E-6 : f32
    %92 = vector.broadcast %cst_70 : f32 to vector<2x1xf32>
    %93 = arith.addf %90, %92 : vector<2x1xf32>
    %94 = math.rsqrt %93 : vector<2x1xf32>
    %95 = arith.mulf %91, %94 : vector<2x1xf32>
    %c0_71 = arith.constant 0 : index
    %c1_72 = arith.constant 1 : index
    %96 = vector.load %arg3[%c0_71, %c1_72] : memref<2x2xf32, #tpu.memory_space<vmem>>, vector<2x1xf32>
    %97 = vector.broadcast %95 : vector<2x1xf32> to vector<2x512xf32>
    %98 = arith.mulf %85, %97 : vector<2x512xf32>
    %99 = vector.broadcast %96 : vector<2x1xf32> to vector<2x512xf32>
    %100 = arith.addf %98, %99 : vector<2x512xf32>
    %cst_73 = arith.constant 0.000000e+00 : f32
    %101 = vector.broadcast %cst_73 : f32 to vector<2x512xf32>
    %102 = arith.maximumf %100, %101 : vector<2x512xf32>
    %103 = vector.extract_strided_slice %102 {offsets = [0, 0], sizes = [2, 256], strides = [1, 1]} : vector<2x512xf32> to vector<2x256xf32>
    %c0_74 = arith.constant 0 : index
    %c0_75 = arith.constant 0 : index
    %c0_76 = arith.constant 0 : index
    %104 = vector.load %arg4[%c0_74, %c0_75, %c0_76] : memref<2x2x256xf32, #tpu.memory_space<vmem>>, vector<1x2x256xf32>
    %105 = vector.shape_cast %104 : vector<1x2x256xf32> to vector<2x256xf32>
    %106 = vector.shape_cast %103 : vector<2x256xf32> to vector<1x2x256xf32>
    tpu.vector_store %arg4[%c0_74, %c0_75, %c0_76], %106 {strides = array<i32>} : memref<2x2x256xf32, #tpu.memory_space<vmem>>, vector<1x2x256xf32>,
    %107 = vector.extract_strided_slice %102 {offsets = [0, 256], sizes = [2, 256], strides = [1, 1]} : vector<2x512xf32> to vector<2x256xf32>
    %c1_77 = arith.constant 1 : index
    %c0_78 = arith.constant 0 : index
    %c0_79 = arith.constant 0 : index
    %108 = vector.load %arg4[%c1_77, %c0_78, %c0_79] : memref<2x2x256xf32, #tpu.memory_space<vmem>>, vector<1x2x256xf32>
    %109 = vector.shape_cast %108 : vector<1x2x256xf32> to vector<2x256xf32>
    %110 = vector.shape_cast %107 : vector<2x256xf32> to vector<1x2x256xf32>
    tpu.vector_store %arg4[%c1_77, %c0_78, %c0_79], %110 {strides = array<i32>} : memref<2x2x256xf32, #tpu.memory_space<vmem>>, vector<1x2x256xf32>,
    return
  }
}

</mosaic_0001>

<llo_original>
// kernel: xzh_pingxing_forward.1
$region0: #{xzh_pingxing_forward.1}
  #allocation0 [shape = 'u32[]', space=smem, size = 0x4, offset = 0x4, fixed_abs, tag = 'smem constant byte address 0x4 - core index']
  #allocation1 [shape = 'u32[144,128]{1,0:T(1,128)}', space=vmem, size = 0x12000, scoped, tag = 'internal scratch']
  #allocation2 [shape = 'bf16[4,768]{1,0:T(4,128)(2,1)}', space=vmem, size = 0x1800, scoped, tag = 'scratch operand']
  %s0 = inlined_call_operand.vmem [shape: f32[2,4,256], index: 0, kind: input, shape index: {}]
  %s1 = inlined_call_operand.vmem [shape: bf16[9,2,4], index: 1, kind: input, shape index: {}]
  %s2 = inlined_call_operand.vmem [shape: f32[9,512], index: 2, kind: input, shape index: {}]
  %s3 = inlined_call_operand.vmem [shape: f32[2,2], index: 3, kind: input, shape index: {}]
  %s4 = inlined_call_operand.vmem [shape: f32[2,2,256], index: 4, kind: output, shape index: {}]
  %s5 = sld [smem:[#allocation0]]
  $region26: #{xzh_pingxing_forward.1} parent=0
    _
  %s7 = ssub.s32 1, %s5
  %s8 = scalar_select 0, %s7, %s5
  // Predicated region
  $region2: #{xzh_pingxing_forward.1} parent=0 // pred_check
    _
  $region3: #{xzh_pingxing_forward.1} parent=0 // pred_check_branch
    %10 = sbr.rel (0) target = $region5
  $region4: #{xzh_pingxing_forward.1} parent=0 // pred_region
    _
  $region5: #{xzh_pingxing_forward.1} parent=0 // pred_fallthru
    _
  // Predicated region
  $region6: #{xzh_pingxing_forward.1} parent=0 // pred_check
    _
  $region7: #{xzh_pingxing_forward.1} parent=0 // pred_check_branch
    %12 = sbr.rel (0) target = $region9
  $region8: #{xzh_pingxing_forward.1} parent=0 // pred_region
    _
  $region9: #{xzh_pingxing_forward.1} parent=0 // pred_fallthru
    _
  // Predicated region
  $region10: #{xzh_pingxing_forward.1} parent=0 // pred_check
    _
  $region11: #{xzh_pingxing_forward.1} parent=0 // pred_check_branch
    %14 = sbr.rel (0) target = $region13
  $region12: #{xzh_pingxing_forward.1} parent=0 // pred_region
    _
  $region13: #{xzh_pingxing_forward.1} parent=0 // pred_fallthru
    _
  // Predicated region
  $region14: #{xzh_pingxing_forward.1} parent=0 // pred_check
    _
  $region15: #{xzh_pingxing_forward.1} parent=0 // pred_check_branch
    %16 = sbr.rel (0) target = $region17
  $region16: #{xzh_pingxing_forward.1} parent=0 // pred_region
    _
  $region17: #{xzh_pingxing_forward.1} parent=0 // pred_fallthru
    _
  %18 = vst [vmem:[#allocation2] sm:$0xff] 0
  %19 = vst [vmem:[#allocation2 + $0x8] sm:$0xf] 0
  %v20 = vld [vmem:[%s0] sm:$0xff]
  %v22 = vcombine.high %v20, %v20
  %v24 = vpack.c.bf16 %v20, %v20
  %v25 = vpack.c.bf16 %v22, %v22
  %v28 = vcombine.low %v24, %v25
  %v30 = vunpack.c.l.s4 1983009808
  %v31 = vunpack.c.0.s8 %v30
  %v32 = vlaneseq
  %v33 = vshrl.u32 %v32, 7
  %v34 = vsub.s32 %v31, %v33
  %v35 = vrot.slane %v28, %v34
  %37 = vst [vmem:[#allocation2 + $0x2] sm:$0xf] %v35
  %s38 = scalar_lea.vmem %s0, 8
  %v39 = vld [vmem:[%s38] sm:$0xff]
  %v41 = vcombine.high %v39, %v39
  %v43 = vpack.c.bf16 %v39, %v39
  %v44 = vpack.c.bf16 %v41, %v41
  %v47 = vcombine.low %v43, %v44
  %v49 = vunpack.c.l.s4 1983009808
  %v50 = vunpack.c.0.s8 %v49
  %v51 = vlaneseq
  %v52 = vshrl.u32 %v51, 7
  %v53 = vsub.s32 %v50, %v52
  %v54 = vrot.slane %v47, %v53
  %56 = vst [vmem:[#allocation2 + $0x6] sm:$0xf] %v54
  %v57 = vld [vmem:[#allocation2] sm:$0xff]
  %v58 = vld [vmem:[#allocation2 + $0x8] sm:$0x3]
  %v59 = vld [vmem:[%s1] sm:$0x1]
  %v62 = vcombine.high %v57, %v57
  %v64 = vunpack.c.l.s4 1983009808
  %v65 = vunpack.c.0.s8 %v64
  %v66 = vlaneseq
  %v67 = vshrl.u32 %v66, 7
  %v68 = vsub.s32 %v65, %v67
  %v69 = vrot.slane %v57, %v68
  %v71 = vunpack.c.l.s4 1983009808
  %v72 = vunpack.c.0.s8 %v71
  %v73 = vlaneseq
  %v74 = vshrl.u32 %v73, 7
  %v75 = vsub.s32 %v72, %v74
  %v76 = vrot.slane %v62, %v75
  %v77 = vcombine.high %v69, %v69
  %v78 = vcombine.high %v76, %v76
  %v80 = vunpack.c.l.s4 1983009808
  %v81 = vunpack.c.0.s8 %v80
  %v82 = vlaneseq
  %v83 = vshrl.u32 %v82, 7
  %v84 = vsub.s32 %v81, %v83
  %v85 = vrot.slane %v58, %v84
  %86 = vrot.lane.b32.xlu0 %v69, 17
  %v87 = vpop.permute.xlu0 %86
  %88 = vrot.lane.b32.xlu0 %v77, 17
  %v89 = vpop.permute.xlu0 %88
  %90 = vrot.lane.b32.xlu0 %v76, 17
  %v91 = vpop.permute.xlu0 %90
  %92 = vrot.lane.b32.xlu0 %v78, 17
  %v93 = vpop.permute.xlu0 %92
  %94 = vrot.lane.b32.xlu0 %v85, 17
  %v95 = vpop.permute.xlu0 %94
  %vm96 = vcmask 138240
  %v97 = vsel %vm96, %v87, %v89
  %v98 = vsel %vm96, %v89, %v91
  %v99 = vsel %vm96, %v91, %v93
  %v100 = vsel %vm96, %v93, %v95
  %vm101 = vcmask 31744
  %v103 = vsel %vm101, %v59, 0
  %vm105 = vcmask 1041408
  %v107 = vsel %vm105, %v97, 0
  %v110 = vsel %vm105, %v98, 0
  %v113 = vsel %vm105, %v99, 0
  %v116 = vsel %vm105, %v100, 0
  %118 = vmatprep.subr.bf16.mxu0 0
  %119 = vmatpush1.bf16.msra.mxu0 0
  %120 = vmatprep.subr.bf16.mxu0 0
  %121 = vmatpush1.bf16.msra.mxu0 0
  %122 = vmatprep.subr.bf16.mxu0 0
  %123 = vmatpush1.bf16.msra.mxu0 0
  %124 = vmatprep.subr.bf16.mxu0 0
  %125 = vmatpush1.bf16.msra.mxu0 0
  %126 = vmatprep.subr.bf16.mxu0 0
  %127 = vmatpush1.bf16.msra.mxu0 0
  %128 = vmatprep.subr.bf16.mxu0 0
  %129 = vmatpush1.bf16.msra.mxu0 0
  %130 = vmatprep.subr.bf16.mxu0 0
  %131 = vmatpush1.bf16.msra.mxu0 0
  %132 = vmatprep.subr.bf16.mxu0 %v110
  %133 = vmatpush1.bf16.msra.mxu0 %v107
  %134 = vmatprep.subr.bf16.mxu0 0
  %135 = vmatpush2.bf16.msra.mxu0 0
  %136 = vmatprep.subr.bf16.mxu0 0
  %137 = vmatpush2.bf16.msra.mxu0 0
  %138 = vmatprep.subr.bf16.mxu0 0
  %139 = vmatpush2.bf16.msra.mxu0 0
  %140 = vmatprep.subr.bf16.mxu0 0
  %141 = vmatpush2.bf16.msra.mxu0 0
  %142 = vmatprep.subr.bf16.mxu0 0
  %143 = vmatpush2.bf16.msra.mxu0 0
  %144 = vmatprep.subr.bf16.mxu0 0
  %145 = vmatpush2.bf16.msra.mxu0 0
  %146 = vmatprep.subr.bf16.mxu0 0
  %147 = vmatpush2.bf16.msra.mxu0 0
  %148 = vmatprep.subr.bf16.mxu0 0
  %149 = vmatpush2.bf16.msra.mxu0 0
  %150 = vmatprep.mubr.bf16.mxu0 0
  %151 = vmatmul.mubr.bf16.gmra.mxu0 %v103
  %v152 = vpop.f32.mrf.mxu0
  %v153 = vadd.f32 0.0, %v152
  %v154 = vpop.f32.mrf.mxu0
  %v155 = vadd.f32 0.0, %v154
  %v156 = vpop.f32.mrf.mxu0
  %v157 = vpop.f32.mrf.mxu0
  %158 = vdwg.mxu0
  %159 = vmatprep.subr.bf16.mxu0 0
  %160 = vmatpush1.bf16.msra.mxu0 0
  %161 = vmatprep.subr.bf16.mxu0 0
  %162 = vmatpush1.bf16.msra.mxu0 0
  %163 = vmatprep.subr.bf16.mxu0 0
  %164 = vmatpush1.bf16.msra.mxu0 0
  %165 = vmatprep.subr.bf16.mxu0 0
  %166 = vmatpush1.bf16.msra.mxu0 0
  %167 = vmatprep.subr.bf16.mxu0 0
  %168 = vmatpush1.bf16.msra.mxu0 0
  %169 = vmatprep.subr.bf16.mxu0 0
  %170 = vmatpush1.bf16.msra.mxu0 0
  %171 = vmatprep.subr.bf16.mxu0 0
  %172 = vmatpush1.bf16.msra.mxu0 0
  %173 = vmatprep.subr.bf16.mxu0 %v116
  %174 = vmatpush1.bf16.msra.mxu0 %v113
  %175 = vmatprep.subr.bf16.mxu0 0
  %176 = vmatpush2.bf16.msra.mxu0 0
  %177 = vmatprep.subr.bf16.mxu0 0
  %178 = vmatpush2.bf16.msra.mxu0 0
  %179 = vmatprep.subr.bf16.mxu0 0
  %180 = vmatpush2.bf16.msra.mxu0 0
  %181 = vmatprep.subr.bf16.mxu0 0
  %182 = vmatpush2.bf16.msra.mxu0 0
  %183 = vmatprep.subr.bf16.mxu0 0
  %184 = vmatpush2.bf16.msra.mxu0 0
  %185 = vmatprep.subr.bf16.mxu0 0
  %186 = vmatpush2.bf16.msra.mxu0 0
  %187 = vmatprep.subr.bf16.mxu0 0
  %188 = vmatpush2.bf16.msra.mxu0 0
  %189 = vmatprep.subr.bf16.mxu0 0
  %190 = vmatpush2.bf16.msra.mxu0 0
  %191 = vmatprep.mubr.bf16.mxu0 0
  %192 = vmatmul.mubr.bf16.gmra.mxu0 %v103
  %v193 = vpop.f32.mrf.mxu0
  %v194 = vadd.f32 0.0, %v193
  %v195 = vpop.f32.mrf.mxu0
  %v196 = vadd.f32 0.0, %v195
  %v197 = vpop.f32.mrf.mxu0
  %v198 = vpop.f32.mrf.mxu0
  %199 = vdwg.mxu0
  %v200 = vld [vmem:[%s2] ss:$8 sm:$0xf]
  %v202 = vlaneseq
  %v203 = vshrl.u32 %v202, 7
  %v204 = vsub.s32 0, %v203
  %v205 = vrot.slane %v200, %v204
  %v206 = vlaneseq
  %v207 = vshrl.u32 %v206, 7
  %v208 = vsub.s32 1, %v207
  %v209 = vrot.slane %v200, %v208
  %v210 = vlaneseq
  %v211 = vshrl.u32 %v210, 7
  %v212 = vsub.s32 2, %v211
  %v213 = vrot.slane %v200, %v212
  %v214 = vlaneseq
  %v215 = vshrl.u32 %v214, 7
  %v216 = vsub.s32 3, %v215
  %v217 = vrot.slane %v200, %v216
  %v222 = vmul.f32 %v153, %v205
  %v223 = vmul.f32 %v155, %v209
  %v224 = vmul.f32 %v194, %v213
  %v225 = vmul.f32 %v196, %v217
  %v226 = vadd.f32 %v222, 0.0
  %v227 = vadd.f32 %v223, 0.0
  %v228 = vadd.f32 %v224, 0.0
  %v229 = vadd.f32 %v225, 0.0
  %v230 = vld [vmem:[#allocation2] sm:$0xff]
  %v231 = vld [vmem:[#allocation2 + $0x8] sm:$0x3]
  %s232 = scalar_lea.vmem %s1, 1
  %v233 = vld [vmem:[%s232] sm:$0x1]
  %v236 = vcombine.high %v230, %v230
  %v238 = vunpack.c.l.s4 1983009808
  %v239 = vunpack.c.0.s8 %v238
  %v240 = vlaneseq
  %v241 = vshrl.u32 %v240, 7
  %v242 = vsub.s32 %v239, %v241
  %v243 = vrot.slane %v230, %v242
  %v245 = vunpack.c.l.s4 1983009808
  %v246 = vunpack.c.0.s8 %v245
  %v247 = vlaneseq
  %v248 = vshrl.u32 %v247, 7
  %v249 = vsub.s32 %v246, %v248
  %v250 = vrot.slane %v236, %v249
  %v251 = vcombine.high %v243, %v243
  %v252 = vcombine.high %v250, %v250
  %v254 = vunpack.c.l.s4 1983009808
  %v255 = vunpack.c.0.s8 %v254
  %v256 = vlaneseq
  %v257 = vshrl.u32 %v256, 7
  %v258 = vsub.s32 %v255, %v257
  %v259 = vrot.slane %v231, %v258
  %260 = vrot.lane.b32.xlu0 %v243, 16
  %v261 = vpop.permute.xlu0 %260
  %262 = vrot.lane.b32.xlu0 %v251, 16
  %v263 = vpop.permute.xlu0 %262
  %264 = vrot.lane.b32.xlu0 %v250, 16
  %v265 = vpop.permute.xlu0 %264
  %266 = vrot.lane.b32.xlu0 %v252, 16
  %v267 = vpop.permute.xlu0 %266
  %268 = vrot.lane.b32.xlu0 %v259, 16
  %v269 = vpop.permute.xlu0 %268
  %vm270 = vcmask 130048
  %v271 = vsel %vm270, %v261, %v263
  %v272 = vsel %vm270, %v263, %v265
  %v273 = vsel %vm270, %v265, %v267
  %v274 = vsel %vm270, %v267, %v269
  %v276 = vsel %vm101, %v233, 0
  %v279 = vsel %vm105, %v271, 0
  %v282 = vsel %vm105, %v272, 0
  %v285 = vsel %vm105, %v273, 0
  %v288 = vsel %vm105, %v274, 0
  %290 = vmatprep.subr.bf16.mxu0 0
  %291 = vmatpush1.bf16.msra.mxu0 0
  %292 = vmatprep.subr.bf16.mxu0 0
  %293 = vmatpush1.bf16.msra.mxu0 0
  %294 = vmatprep.subr.bf16.mxu0 0
  %295 = vmatpush1.bf16.msra.mxu0 0
  %296 = vmatprep.subr.bf16.mxu0 0
  %297 = vmatpush1.bf16.msra.mxu0 0
  %298 = vmatprep.subr.bf16.mxu0 0
  %299 = vmatpush1.bf16.msra.mxu0 0
  %300 = vmatprep.subr.bf16.mxu0 0
  %301 = vmatpush1.bf16.msra.mxu0 0
  %302 = vmatprep.subr.bf16.mxu0 0
  %303 = vmatpush1.bf16.msra.mxu0 0
  %304 = vmatprep.subr.bf16.mxu0 %v282
  %305 = vmatpush1.bf16.msra.mxu0 %v279
  %306 = vmatprep.subr.bf16.mxu0 0
  %307 = vmatpush2.bf16.msra.mxu0 0
  %308 = vmatprep.subr.bf16.mxu0 0
  %309 = vmatpush2.bf16.msra.mxu0 0
  %310 = vmatprep.subr.bf16.mxu0 0
  %311 = vmatpush2.bf16.msra.mxu0 0
  %312 = vmatprep.subr.bf16.mxu0 0
  %313 = vmatpush2.bf16.msra.mxu0 0
  %314 = vmatprep.subr.bf16.mxu0 0
  %315 = vmatpush2.bf16.msra.mxu0 0
  %316 = vmatprep.subr.bf16.mxu0 0
  %317 = vmatpush2.bf16.msra.mxu0 0
  %318 = vmatprep.subr.bf16.mxu0 0
  %319 = vmatpush2.bf16.msra.mxu0 0
  %320 = vmatprep.subr.bf16.mxu0 0
  %321 = vmatpush2.bf16.msra.mxu0 0
  %322 = vmatprep.mubr.bf16.mxu0 0
  %323 = vmatmul.mubr.bf16.gmra.mxu0 %v276
  %v324 = vpop.f32.mrf.mxu0
  %v325 = vadd.f32 0.0, %v324
  %v326 = vpop.f32.mrf.mxu0
  %v327 = vadd.f32 0.0, %v326
  %v328 = vpop.f32.mrf.mxu0
  %v329 = vpop.f32.mrf.mxu0
  %330 = vdwg.mxu0
  %331 = vmatprep.subr.bf16.mxu0 0
  %332 = vmatpush1.bf16.msra.mxu0 0
  %333 = vmatprep.subr.bf16.mxu0 0
  %334 = vmatpush1.bf16.msra.mxu0 0
  %335 = vmatprep.subr.bf16.mxu0 0
  %336 = vmatpush1.bf16.msra.mxu0 0
  %337 = vmatprep.subr.bf16.mxu0 0
  %338 = vmatpush1.bf16.msra.mxu0 0
  %339 = vmatprep.subr.bf16.mxu0 0
  %340 = vmatpush1.bf16.msra.mxu0 0
  %341 = vmatprep.subr.bf16.mxu0 0
  %342 = vmatpush1.bf16.msra.mxu0 0
  %343 = vmatprep.subr.bf16.mxu0 0
  %344 = vmatpush1.bf16.msra.mxu0 0
  %345 = vmatprep.subr.bf16.mxu0 %v288
  %346 = vmatpush1.bf16.msra.mxu0 %v285
  %347 = vmatprep.subr.bf16.mxu0 0
  %348 = vmatpush2.bf16.msra.mxu0 0
  %349 = vmatprep.subr.bf16.mxu0 0
  %350 = vmatpush2.bf16.msra.mxu0 0
  %351 = vmatprep.subr.bf16.mxu0 0
  %352 = vmatpush2.bf16.msra.mxu0 0
  %353 = vmatprep.subr.bf16.mxu0 0
  %354 = vmatpush2.bf16.msra.mxu0 0
  %355 = vmatprep.subr.bf16.mxu0 0
  %356 = vmatpush2.bf16.msra.mxu0 0
  %357 = vmatprep.subr.bf16.mxu0 0
  %358 = vmatpush2.bf16.msra.mxu0 0
  %359 = vmatprep.subr.bf16.mxu0 0
  %360 = vmatpush2.bf16.msra.mxu0 0
  %361 = vmatprep.subr.bf16.mxu0 0
  %362 = vmatpush2.bf16.msra.mxu0 0
  %363 = vmatprep.mubr.bf16.mxu0 0
  %364 = vmatmul.mubr.bf16.gmra.mxu0 %v276
  %v365 = vpop.f32.mrf.mxu0
  %v366 = vadd.f32 0.0, %v365
  %v367 = vpop.f32.mrf.mxu0
  %v368 = vadd.f32 0.0, %v367
  %v369 = vpop.f32.mrf.mxu0
  %v370 = vpop.f32.mrf.mxu0
  %371 = vdwg.mxu0
  %s372 = scalar_lea.vmem %s2, 1
  %v373 = vld [vmem:[%s372] ss:$8 sm:$0xf]
  %v375 = vlaneseq
  %v376 = vshrl.u32 %v375, 7
  %v377 = vsub.s32 0, %v376
  %v378 = vrot.slane %v373, %v377
  %v379 = vlaneseq
  %v380 = vshrl.u32 %v379, 7
  %v381 = vsub.s32 1, %v380
  %v382 = vrot.slane %v373, %v381
  %v383 = vlaneseq
  %v384 = vshrl.u32 %v383, 7
  %v385 = vsub.s32 2, %v384
  %v386 = vrot.slane %v373, %v385
  %v387 = vlaneseq
  %v388 = vshrl.u32 %v387, 7
  %v389 = vsub.s32 3, %v388
  %v390 = vrot.slane %v373, %v389
  %v395 = vmul.f32 %v325, %v378
  %v396 = vmul.f32 %v327, %v382
  %v397 = vmul.f32 %v366, %v386
  %v398 = vmul.f32 %v368, %v390
  %v399 = vadd.f32 %v226, %v395
  %v400 = vadd.f32 %v227, %v396
  %v401 = vadd.f32 %v228, %v397
  %v402 = vadd.f32 %v229, %v398
  %v403 = vld [vmem:[#allocation2] sm:$0xff]
  %v404 = vld [vmem:[#allocation2 + $0x8] sm:$0x3]
  %s405 = scalar_lea.vmem %s1, 2
  %v406 = vld [vmem:[%s405] sm:$0x1]
  %v409 = vcombine.high %v403, %v403
  %v411 = vunpack.c.l.s4 1983009808
  %v412 = vunpack.c.0.s8 %v411
  %v413 = vlaneseq
  %v414 = vshrl.u32 %v413, 7
  %v415 = vsub.s32 %v412, %v414
  %v416 = vrot.slane %v403, %v415
  %v418 = vunpack.c.l.s4 1983009808
  %v419 = vunpack.c.0.s8 %v418
  %v420 = vlaneseq
  %v421 = vshrl.u32 %v420, 7
  %v422 = vsub.s32 %v419, %v421
  %v423 = vrot.slane %v409, %v422
  %v424 = vcombine.high %v416, %v416
  %v425 = vcombine.high %v423, %v423
  %v427 = vunpack.c.l.s4 1983009808
  %v428 = vunpack.c.0.s8 %v427
  %v429 = vlaneseq
  %v430 = vshrl.u32 %v429, 7
  %v431 = vsub.s32 %v428, %v430
  %v432 = vrot.slane %v404, %v431
  %433 = vrot.lane.b32.xlu0 %v416, 15
  %v434 = vpop.permute.xlu0 %433
  %435 = vrot.lane.b32.xlu0 %v424, 15
  %v436 = vpop.permute.xlu0 %435
  %437 = vrot.lane.b32.xlu0 %v423, 15
  %v438 = vpop.permute.xlu0 %437
  %439 = vrot.lane.b32.xlu0 %v425, 15
  %v440 = vpop.permute.xlu0 %439
  %441 = vrot.lane.b32.xlu0 %v432, 15
  %v442 = vpop.permute.xlu0 %441
  %vm443 = vcmask 121856
  %v444 = vsel %vm443, %v434, %v436
  %v445 = vsel %vm443, %v436, %v438
  %v446 = vsel %vm443, %v438, %v440
  %v447 = vsel %vm443, %v440, %v442
  %v449 = vsel %vm101, %v406, 0
  %v452 = vsel %vm105, %v444, 0
  %v455 = vsel %vm105, %v445, 0
  %v458 = vsel %vm105, %v446, 0
  %v461 = vsel %vm105, %v447, 0
  %463 = vmatprep.subr.bf16.mxu0 0
  %464 = vmatpush1.bf16.msra.mxu0 0
  %465 = vmatprep.subr.bf16.mxu0 0
  %466 = vmatpush1.bf16.msra.mxu0 0
  %467 = vmatprep.subr.bf16.mxu0 0
  %468 = vmatpush1.bf16.msra.mxu0 0
  %469 = vmatprep.subr.bf16.mxu0 0
  %470 = vmatpush1.bf16.msra.mxu0 0
  %471 = vmatprep.subr.bf16.mxu0 0
  %472 = vmatpush1.bf16.msra.mxu0 0
  %473 = vmatprep.subr.bf16.mxu0 0
  %474 = vmatpush1.bf16.msra.mxu0 0
  %475 = vmatprep.subr.bf16.mxu0 0
  %476 = vmatpush1.bf16.msra.mxu0 0
  %477 = vmatprep.subr.bf16.mxu0 %v455
  %478 = vmatpush1.bf16.msra.mxu0 %v452
  %479 = vmatprep.subr.bf16.mxu0 0
  %480 = vmatpush2.bf16.msra.mxu0 0
  %481 = vmatprep.subr.bf16.mxu0 0
  %482 = vmatpush2.bf16.msra.mxu0 0
  %483 = vmatprep.subr.bf16.mxu0 0
  %484 = vmatpush2.bf16.msra.mxu0 0
  %485 = vmatprep.subr.bf16.mxu0 0
  %486 = vmatpush2.bf16.msra.mxu0 0
  %487 = vmatprep.subr.bf16.mxu0 0
  %488 = vmatpush2.bf16.msra.mxu0 0
  %489 = vmatprep.subr.bf16.mxu0 0
  %490 = vmatpush2.bf16.msra.mxu0 0
  %491 = vmatprep.subr.bf16.mxu0 0
  %492 = vmatpush2.bf16.msra.mxu0 0
  %493 = vmatprep.subr.bf16.mxu0 0
  %494 = vmatpush2.bf16.msra.mxu0 0
  %495 = vmatprep.mubr.bf16.mxu0 0
  %496 = vmatmul.mubr.bf16.gmra.mxu0 %v449
  %v497 = vpop.f32.mrf.mxu0
  %v498 = vadd.f32 0.0, %v497
  %v499 = vpop.f32.mrf.mxu0
  %v500 = vadd.f32 0.0, %v499
  %v501 = vpop.f32.mrf.mxu0
  %v502 = vpop.f32.mrf.mxu0
  %503 = vdwg.mxu0
  %504 = vmatprep.subr.bf16.mxu0 0
  %505 = vmatpush1.bf16.msra.mxu0 0
  %506 = vmatprep.subr.bf16.mxu0 0
  %507 = vmatpush1.bf16.msra.mxu0 0
  %508 = vmatprep.subr.bf16.mxu0 0
  %509 = vmatpush1.bf16.msra.mxu0 0
  %510 = vmatprep.subr.bf16.mxu0 0
  %511 = vmatpush1.bf16.msra.mxu0 0
  %512 = vmatprep.subr.bf16.mxu0 0
  %513 = vmatpush1.bf16.msra.mxu0 0
  %514 = vmatprep.subr.bf16.mxu0 0
  %515 = vmatpush1.bf16.msra.mxu0 0
  %516 = vmatprep.subr.bf16.mxu0 0
  %517 = vmatpush1.bf16.msra.mxu0 0
  %518 = vmatprep.subr.bf16.mxu0 %v461
  %519 = vmatpush1.bf16.msra.mxu0 %v458
  %520 = vmatprep.subr.bf16.mxu0 0
  %521 = vmatpush2.bf16.msra.mxu0 0
  %522 = vmatprep.subr.bf16.mxu0 0
  %523 = vmatpush2.bf16.msra.mxu0 0
  %524 = vmatprep.subr.bf16.mxu0 0
  %525 = vmatpush2.bf16.msra.mxu0 0
  %526 = vmatprep.subr.bf16.mxu0 0
  %527 = vmatpush2.bf16.msra.mxu0 0
  %528 = vmatprep.subr.bf16.mxu0 0
  %529 = vmatpush2.bf16.msra.mxu0 0
  %530 = vmatprep.subr.bf16.mxu0 0
  %531 = vmatpush2.bf16.msra.mxu0 0
  %532 = vmatprep.subr.bf16.mxu0 0
  %533 = vmatpush2.bf16.msra.mxu0 0
  %534 = vmatprep.subr.bf16.mxu0 0
  %535 = vmatpush2.bf16.msra.mxu0 0
  %536 = vmatprep.mubr.bf16.mxu0 0
  %537 = vmatmul.mubr.bf16.gmra.mxu0 %v449
  %v538 = vpop.f32.mrf.mxu0
  %v539 = vadd.f32 0.0, %v538
  %v540 = vpop.f32.mrf.mxu0
  %v541 = vadd.f32 0.0, %v540
  %v542 = vpop.f32.mrf.mxu0
  %v543 = vpop.f32.mrf.mxu0
  %544 = vdwg.mxu0
  %s545 = scalar_lea.vmem %s2, 2
  %v546 = vld [vmem:[%s545] ss:$8 sm:$0xf]
  %v548 = vlaneseq
  %v549 = vshrl.u32 %v548, 7
  %v550 = vsub.s32 0, %v549
  %v551 = vrot.slane %v546, %v550
  %v552 = vlaneseq
  %v553 = vshrl.u32 %v552, 7
  %v554 = vsub.s32 1, %v553
  %v555 = vrot.slane %v546, %v554
  %v556 = vlaneseq
  %v557 = vshrl.u32 %v556, 7
  %v558 = vsub.s32 2, %v557
  %v559 = vrot.slane %v546, %v558
  %v560 = vlaneseq
  %v561 = vshrl.u32 %v560, 7
  %v562 = vsub.s32 3, %v561
  %v563 = vrot.slane %v546, %v562
  %v568 = vmul.f32 %v498, %v551
  %v569 = vmul.f32 %v500, %v555
  %v570 = vmul.f32 %v539, %v559
  %v571 = vmul.f32 %v541, %v563
  %v572 = vadd.f32 %v399, %v568
  %v573 = vadd.f32 %v400, %v569
  %v574 = vadd.f32 %v401, %v570
  %v575 = vadd.f32 %v402, %v571
  %v576 = vld [vmem:[#allocation2] sm:$0xff]
  %v577 = vld [vmem:[#allocation2 + $0x8] sm:$0x3]
  %s578 = scalar_lea.vmem %s1, 3
  %v579 = vld [vmem:[%s578] sm:$0x1]
  %v582 = vcombine.high %v576, %v576
  %v584 = vunpack.c.l.s4 1983009808
  %v585 = vunpack.c.0.s8 %v584
  %v586 = vlaneseq
  %v587 = vshrl.u32 %v586, 7
  %v588 = vsub.s32 %v585, %v587
  %v589 = vrot.slane %v576, %v588
  %v591 = vunpack.c.l.s4 1983009808
  %v592 = vunpack.c.0.s8 %v591
  %v593 = vlaneseq
  %v594 = vshrl.u32 %v593, 7
  %v595 = vsub.s32 %v592, %v594
  %v596 = vrot.slane %v582, %v595
  %v597 = vcombine.high %v589, %v589
  %v598 = vcombine.high %v596, %v596
  %v600 = vunpack.c.l.s4 1983009808
  %v601 = vunpack.c.0.s8 %v600
  %v602 = vlaneseq
  %v603 = vshrl.u32 %v602, 7
  %v604 = vsub.s32 %v601, %v603
  %v605 = vrot.slane %v577, %v604
  %606 = vrot.lane.b32.xlu0 %v589, 1
  %v607 = vpop.permute.xlu0 %606
  %608 = vrot.lane.b32.xlu0 %v597, 1
  %v609 = vpop.permute.xlu0 %608
  %610 = vrot.lane.b32.xlu0 %v596, 1
  %v611 = vpop.permute.xlu0 %610
  %612 = vrot.lane.b32.xlu0 %v598, 1
  %v613 = vpop.permute.xlu0 %612
  %614 = vrot.lane.b32.xlu0 %v605, 1
  %v615 = vpop.permute.xlu0 %614
  %vm616 = vcmask 7168
  %v617 = vsel %vm616, %v607, %v609
  %v618 = vsel %vm616, %v609, %v611
  %v619 = vsel %vm616, %v611, %v613
  %v620 = vsel %vm616, %v613, %v615
  %v622 = vsel %vm101, %v579, 0
  %v625 = vsel %vm105, %v617, 0
  %v628 = vsel %vm105, %v618, 0
  %v631 = vsel %vm105, %v619, 0
  %v634 = vsel %vm105, %v620, 0
  %636 = vmatprep.subr.bf16.mxu0 0
  %637 = vmatpush1.bf16.msra.mxu0 0
  %638 = vmatprep.subr.bf16.mxu0 0
  %639 = vmatpush1.bf16.msra.mxu0 0
  %640 = vmatprep.subr.bf16.mxu0 0
  %641 = vmatpush1.bf16.msra.mxu0 0
  %642 = vmatprep.subr.bf16.mxu0 0
  %643 = vmatpush1.bf16.msra.mxu0 0
  %644 = vmatprep.subr.bf16.mxu0 0
  %645 = vmatpush1.bf16.msra.mxu0 0
  %646 = vmatprep.subr.bf16.mxu0 0
  %647 = vmatpush1.bf16.msra.mxu0 0
  %648 = vmatprep.subr.bf16.mxu0 0
  %649 = vmatpush1.bf16.msra.mxu0 0
  %650 = vmatprep.subr.bf16.mxu0 %v628
  %651 = vmatpush1.bf16.msra.mxu0 %v625
  %652 = vmatprep.subr.bf16.mxu0 0
  %653 = vmatpush2.bf16.msra.mxu0 0
  %654 = vmatprep.subr.bf16.mxu0 0
  %655 = vmatpush2.bf16.msra.mxu0 0
  %656 = vmatprep.subr.bf16.mxu0 0
  %657 = vmatpush2.bf16.msra.mxu0 0
  %658 = vmatprep.subr.bf16.mxu0 0
  %659 = vmatpush2.bf16.msra.mxu0 0
  %660 = vmatprep.subr.bf16.mxu0 0
  %661 = vmatpush2.bf16.msra.mxu0 0
  %662 = vmatprep.subr.bf16.mxu0 0
  %663 = vmatpush2.bf16.msra.mxu0 0
  %664 = vmatprep.subr.bf16.mxu0 0
  %665 = vmatpush2.bf16.msra.mxu0 0
  %666 = vmatprep.subr.bf16.mxu0 0
  %667 = vmatpush2.bf16.msra.mxu0 0
  %668 = vmatprep.mubr.bf16.mxu0 0
  %669 = vmatmul.mubr.bf16.gmra.mxu0 %v622
  %v670 = vpop.f32.mrf.mxu0
  %v671 = vadd.f32 0.0, %v670
  %v672 = vpop.f32.mrf.mxu0
  %v673 = vadd.f32 0.0, %v672
  %v674 = vpop.f32.mrf.mxu0
  %v675 = vpop.f32.mrf.mxu0
  %676 = vdwg.mxu0
  %677 = vmatprep.subr.bf16.mxu0 0
  %678 = vmatpush1.bf16.msra.mxu0 0
  %679 = vmatprep.subr.bf16.mxu0 0
  %680 = vmatpush1.bf16.msra.mxu0 0
  %681 = vmatprep.subr.bf16.mxu0 0
  %682 = vmatpush1.bf16.msra.mxu0 0
  %683 = vmatprep.subr.bf16.mxu0 0
  %684 = vmatpush1.bf16.msra.mxu0 0
  %685 = vmatprep.subr.bf16.mxu0 0
  %686 = vmatpush1.bf16.msra.mxu0 0
  %687 = vmatprep.subr.bf16.mxu0 0
  %688 = vmatpush1.bf16.msra.mxu0 0
  %689 = vmatprep.subr.bf16.mxu0 0
  %690 = vmatpush1.bf16.msra.mxu0 0
  %691 = vmatprep.subr.bf16.mxu0 %v634
  %692 = vmatpush1.bf16.msra.mxu0 %v631
  %693 = vmatprep.subr.bf16.mxu0 0
  %694 = vmatpush2.bf16.msra.mxu0 0
  %695 = vmatprep.subr.bf16.mxu0 0
  %696 = vmatpush2.bf16.msra.mxu0 0
  %697 = vmatprep.subr.bf16.mxu0 0
  %698 = vmatpush2.bf16.msra.mxu0 0
  %699 = vmatprep.subr.bf16.mxu0 0
  %700 = vmatpush2.bf16.msra.mxu0 0
  %701 = vmatprep.subr.bf16.mxu0 0
  %702 = vmatpush2.bf16.msra.mxu0 0
  %703 = vmatprep.subr.bf16.mxu0 0
  %704 = vmatpush2.bf16.msra.mxu0 0
  %705 = vmatprep.subr.bf16.mxu0 0
  %706 = vmatpush2.bf16.msra.mxu0 0
  %707 = vmatprep.subr.bf16.mxu0 0
  %708 = vmatpush2.bf16.msra.mxu0 0
  %709 = vmatprep.mubr.bf16.mxu0 0
  %710 = vmatmul.mubr.bf16.gmra.mxu0 %v622
  %v711 = vpop.f32.mrf.mxu0
  %v712 = vadd.f32 0.0, %v711
  %v713 = vpop.f32.mrf.mxu0
  %v714 = vadd.f32 0.0, %v713
  %v715 = vpop.f32.mrf.mxu0
  %v716 = vpop.f32.mrf.mxu0
  %717 = vdwg.mxu0
  %s718 = scalar_lea.vmem %s2, 3
  %v719 = vld [vmem:[%s718] ss:$8 sm:$0xf]
  %v721 = vlaneseq
  %v722 = vshrl.u32 %v721, 7
  %v723 = vsub.s32 0, %v722
  %v724 = vrot.slane %v719, %v723
  %v725 = vlaneseq
  %v726 = vshrl.u32 %v725, 7
  %v727 = vsub.s32 1, %v726
  %v728 = vrot.slane %v719, %v727
  %v729 = vlaneseq
  %v730 = vshrl.u32 %v729, 7
  %v731 = vsub.s32 2, %v730
  %v732 = vrot.slane %v719, %v731
  %v733 = vlaneseq
  %v734 = vshrl.u32 %v733, 7
  %v735 = vsub.s32 3, %v734
  %v736 = vrot.slane %v719, %v735
  %v741 = vmul.f32 %v671, %v724
  %v742 = vmul.f32 %v673, %v728
  %v743 = vmul.f32 %v712, %v732
  %v744 = vmul.f32 %v714, %v736
  %v745 = vadd.f32 %v572, %v741
  %v746 = vadd.f32 %v573, %v742
  %v747 = vadd.f32 %v574, %v743
  %v748 = vadd.f32 %v575, %v744
  %v749 = vld [vmem:[#allocation2 + $0x2] sm:$0xff]
  %s750 = scalar_lea.vmem %s1, 4
  %v751 = vld [vmem:[%s750] sm:$0x1]
  %v753 = vcombine.high %v749, %v749
  %v755 = vunpack.c.l.s4 1983009808
  %v756 = vunpack.c.0.s8 %v755
  %v757 = vlaneseq
  %v758 = vshrl.u32 %v757, 7
  %v759 = vsub.s32 %v756, %v758
  %v760 = vrot.slane %v749, %v759
  %v762 = vunpack.c.l.s4 1983009808
  %v763 = vunpack.c.0.s8 %v762
  %v764 = vlaneseq
  %v765 = vshrl.u32 %v764, 7
  %v766 = vsub.s32 %v763, %v765
  %v767 = vrot.slane %v753, %v766
  %v768 = vcombine.high %v760, %v760
  %v769 = vcombine.high %v767, %v767
  %v771 = vsel %vm101, %v751, 0
  %v774 = vsel %vm105, %v760, 0
  %v777 = vsel %vm105, %v768, 0
  %v780 = vsel %vm105, %v767, 0
  %v783 = vsel %vm105, %v769, 0
  %785 = vmatprep.subr.bf16.mxu0 0
  %786 = vmatpush1.bf16.msra.mxu0 0
  %787 = vmatprep.subr.bf16.mxu0 0
  %788 = vmatpush1.bf16.msra.mxu0 0
  %789 = vmatprep.subr.bf16.mxu0 0
  %790 = vmatpush1.bf16.msra.mxu0 0
  %791 = vmatprep.subr.bf16.mxu0 0
  %792 = vmatpush1.bf16.msra.mxu0 0
  %793 = vmatprep.subr.bf16.mxu0 0
  %794 = vmatpush1.bf16.msra.mxu0 0
  %795 = vmatprep.subr.bf16.mxu0 0
  %796 = vmatpush1.bf16.msra.mxu0 0
  %797 = vmatprep.subr.bf16.mxu0 0
  %798 = vmatpush1.bf16.msra.mxu0 0
  %799 = vmatprep.subr.bf16.mxu0 %v777
  %800 = vmatpush1.bf16.msra.mxu0 %v774
  %801 = vmatprep.subr.bf16.mxu0 0
  %802 = vmatpush2.bf16.msra.mxu0 0
  %803 = vmatprep.subr.bf16.mxu0 0
  %804 = vmatpush2.bf16.msra.mxu0 0
  %805 = vmatprep.subr.bf16.mxu0 0
  %806 = vmatpush2.bf16.msra.mxu0 0
  %807 = vmatprep.subr.bf16.mxu0 0
  %808 = vmatpush2.bf16.msra.mxu0 0
  %809 = vmatprep.subr.bf16.mxu0 0
  %810 = vmatpush2.bf16.msra.mxu0 0
  %811 = vmatprep.subr.bf16.mxu0 0
  %812 = vmatpush2.bf16.msra.mxu0 0
  %813 = vmatprep.subr.bf16.mxu0 0
  %814 = vmatpush2.bf16.msra.mxu0 0
  %815 = vmatprep.subr.bf16.mxu0 0
  %816 = vmatpush2.bf16.msra.mxu0 0
  %817 = vmatprep.mubr.bf16.mxu0 0
  %818 = vmatmul.mubr.bf16.gmra.mxu0 %v771
  %v819 = vpop.f32.mrf.mxu0
  %v820 = vadd.f32 0.0, %v819
  %v821 = vpop.f32.mrf.mxu0
  %v822 = vadd.f32 0.0, %v821
  %v823 = vpop.f32.mrf.mxu0
  %v824 = vpop.f32.mrf.mxu0
  %825 = vdwg.mxu0
  %826 = vmatprep.subr.bf16.mxu0 0
  %827 = vmatpush1.bf16.msra.mxu0 0
  %828 = vmatprep.subr.bf16.mxu0 0
  %829 = vmatpush1.bf16.msra.mxu0 0
  %830 = vmatprep.subr.bf16.mxu0 0
  %831 = vmatpush1.bf16.msra.mxu0 0
  %832 = vmatprep.subr.bf16.mxu0 0
  %833 = vmatpush1.bf16.msra.mxu0 0
  %834 = vmatprep.subr.bf16.mxu0 0
  %835 = vmatpush1.bf16.msra.mxu0 0
  %836 = vmatprep.subr.bf16.mxu0 0
  %837 = vmatpush1.bf16.msra.mxu0 0
  %838 = vmatprep.subr.bf16.mxu0 0
  %839 = vmatpush1.bf16.msra.mxu0 0
  %840 = vmatprep.subr.bf16.mxu0 %v783
  %841 = vmatpush1.bf16.msra.mxu0 %v780
  %842 = vmatprep.subr.bf16.mxu0 0
  %843 = vmatpush2.bf16.msra.mxu0 0
  %844 = vmatprep.subr.bf16.mxu0 0
  %845 = vmatpush2.bf16.msra.mxu0 0
  %846 = vmatprep.subr.bf16.mxu0 0
  %847 = vmatpush2.bf16.msra.mxu0 0
  %848 = vmatprep.subr.bf16.mxu0 0
  %849 = vmatpush2.bf16.msra.mxu0 0
  %850 = vmatprep.subr.bf16.mxu0 0
  %851 = vmatpush2.bf16.msra.mxu0 0
  %852 = vmatprep.subr.bf16.mxu0 0
  %853 = vmatpush2.bf16.msra.mxu0 0
  %854 = vmatprep.subr.bf16.mxu0 0
  %855 = vmatpush2.bf16.msra.mxu0 0
  %856 = vmatprep.subr.bf16.mxu0 0
  %857 = vmatpush2.bf16.msra.mxu0 0
  %858 = vmatprep.mubr.bf16.mxu0 0
  %859 = vmatmul.mubr.bf16.gmra.mxu0 %v771
  %v860 = vpop.f32.mrf.mxu0
  %v861 = vadd.f32 0.0, %v860
  %v862 = vpop.f32.mrf.mxu0
  %v863 = vadd.f32 0.0, %v862
  %v864 = vpop.f32.mrf.mxu0
  %v865 = vpop.f32.mrf.mxu0
  %866 = vdwg.mxu0
  %v867 = vadd.f32 %v745, %v820
  %v868 = vadd.f32 %v746, %v822
  %v869 = vadd.f32 %v747, %v861
  %v870 = vadd.f32 %v748, %v863
  %v871 = vld [vmem:[#allocation2 + $0x2] sm:$0xff]
  %v872 = vld [vmem:[#allocation2 + $0xa] sm:$0x3]
  %s873 = scalar_lea.vmem %s1, 5
  %v874 = vld [vmem:[%s873] sm:$0x1]
  %v877 = vcombine.high %v871, %v871
  %v879 = vunpack.c.l.s4 1983009808
  %v880 = vunpack.c.0.s8 %v879
  %v881 = vlaneseq
  %v882 = vshrl.u32 %v881, 7
  %v883 = vsub.s32 %v880, %v882
  %v884 = vrot.slane %v871, %v883
  %v886 = vunpack.c.l.s4 1983009808
  %v887 = vunpack.c.0.s8 %v886
  %v888 = vlaneseq
  %v889 = vshrl.u32 %v888, 7
  %v890 = vsub.s32 %v887, %v889
  %v891 = vrot.slane %v877, %v890
  %v892 = vcombine.high %v884, %v884
  %v893 = vcombine.high %v891, %v891
  %v895 = vunpack.c.l.s4 1983009808
  %v896 = vunpack.c.0.s8 %v895
  %v897 = vlaneseq
  %v898 = vshrl.u32 %v897, 7
  %v899 = vsub.s32 %v896, %v898
  %v900 = vrot.slane %v872, %v899
  %901 = vrot.lane.b32.xlu0 %v884, 127
  %v902 = vpop.permute.xlu0 %901
  %903 = vrot.lane.b32.xlu0 %v892, 127
  %v904 = vpop.permute.xlu0 %903
  %905 = vrot.lane.b32.xlu0 %v891, 127
  %v906 = vpop.permute.xlu0 %905
  %907 = vrot.lane.b32.xlu0 %v893, 127
  %v908 = vpop.permute.xlu0 %907
  %909 = vrot.lane.b32.xlu0 %v900, 127
  %v910 = vpop.permute.xlu0 %909
  %vm911 = vcmask 1039360
  %v912 = vsel %vm911, %v902, %v904
  %v913 = vsel %vm911, %v904, %v906
  %v914 = vsel %vm911, %v906, %v908
  %v915 = vsel %vm911, %v908, %v910
  %v917 = vsel %vm101, %v874, 0
  %v920 = vsel %vm105, %v912, 0
  %v923 = vsel %vm105, %v913, 0
  %v926 = vsel %vm105, %v914, 0
  %v929 = vsel %vm105, %v915, 0
  %931 = vmatprep.subr.bf16.mxu0 0
  %932 = vmatpush1.bf16.msra.mxu0 0
  %933 = vmatprep.subr.bf16.mxu0 0
  %934 = vmatpush1.bf16.msra.mxu0 0
  %935 = vmatprep.subr.bf16.mxu0 0
  %936 = vmatpush1.bf16.msra.mxu0 0
  %937 = vmatprep.subr.bf16.mxu0 0
  %938 = vmatpush1.bf16.msra.mxu0 0
  %939 = vmatprep.subr.bf16.mxu0 0
  %940 = vmatpush1.bf16.msra.mxu0 0
  %941 = vmatprep.subr.bf16.mxu0 0
  %942 = vmatpush1.bf16.msra.mxu0 0
  %943 = vmatprep.subr.bf16.mxu0 0
  %944 = vmatpush1.bf16.msra.mxu0 0
  %945 = vmatprep.subr.bf16.mxu0 %v923
  %946 = vmatpush1.bf16.msra.mxu0 %v920
  %947 = vmatprep.subr.bf16.mxu0 0
  %948 = vmatpush2.bf16.msra.mxu0 0
  %949 = vmatprep.subr.bf16.mxu0 0
  %950 = vmatpush2.bf16.msra.mxu0 0
  %951 = vmatprep.subr.bf16.mxu0 0
  %952 = vmatpush2.bf16.msra.mxu0 0
  %953 = vmatprep.subr.bf16.mxu0 0
  %954 = vmatpush2.bf16.msra.mxu0 0
  %955 = vmatprep.subr.bf16.mxu0 0
  %956 = vmatpush2.bf16.msra.mxu0 0
  %957 = vmatprep.subr.bf16.mxu0 0
  %958 = vmatpush2.bf16.msra.mxu0 0
  %959 = vmatprep.subr.bf16.mxu0 0
  %960 = vmatpush2.bf16.msra.mxu0 0
  %961 = vmatprep.subr.bf16.mxu0 0
  %962 = vmatpush2.bf16.msra.mxu0 0
  %963 = vmatprep.mubr.bf16.mxu0 0
  %964 = vmatmul.mubr.bf16.gmra.mxu0 %v917
  %v965 = vpop.f32.mrf.mxu0
  %v966 = vadd.f32 0.0, %v965
  %v967 = vpop.f32.mrf.mxu0
  %v968 = vadd.f32 0.0, %v967
  %v969 = vpop.f32.mrf.mxu0
  %v970 = vpop.f32.mrf.mxu0
  %971 = vdwg.mxu0
  %972 = vmatprep.subr.bf16.mxu0 0
  %973 = vmatpush1.bf16.msra.mxu0 0
  %974 = vmatprep.subr.bf16.mxu0 0
  %975 = vmatpush1.bf16.msra.mxu0 0
  %976 = vmatprep.subr.bf16.mxu0 0
  %977 = vmatpush1.bf16.msra.mxu0 0
  %978 = vmatprep.subr.bf16.mxu0 0
  %979 = vmatpush1.bf16.msra.mxu0 0
  %980 = vmatprep.subr.bf16.mxu0 0
  %981 = vmatpush1.bf16.msra.mxu0 0
  %982 = vmatprep.subr.bf16.mxu0 0
  %983 = vmatpush1.bf16.msra.mxu0 0
  %984 = vmatprep.subr.bf16.mxu0 0
  %985 = vmatpush1.bf16.msra.mxu0 0
  %986 = vmatprep.subr.bf16.mxu0 %v929
  %987 = vmatpush1.bf16.msra.mxu0 %v926
  %988 = vmatprep.subr.bf16.mxu0 0
  %989 = vmatpush2.bf16.msra.mxu0 0
  %990 = vmatprep.subr.bf16.mxu0 0
  %991 = vmatpush2.bf16.msra.mxu0 0
  %992 = vmatprep.subr.bf16.mxu0 0
  %993 = vmatpush2.bf16.msra.mxu0 0
  %994 = vmatprep.subr.bf16.mxu0 0
  %995 = vmatpush2.bf16.msra.mxu0 0
  %996 = vmatprep.subr.bf16.mxu0 0
  %997 = vmatpush2.bf16.msra.mxu0 0
  %998 = vmatprep.subr.bf16.mxu0 0
  %999 = vmatpush2.bf16.msra.mxu0 0
  %1000 = vmatprep.subr.bf16.mxu0 0
  %1001 = vmatpush2.bf16.msra.mxu0 0
  %1002 = vmatprep.subr.bf16.mxu0 0
  %1003 = vmatpush2.bf16.msra.mxu0 0
  %1004 = vmatprep.mubr.bf16.mxu0 0
  %1005 = vmatmul.mubr.bf16.gmra.mxu0 %v917
  %v1006 = vpop.f32.mrf.mxu0
  %v1007 = vadd.f32 0.0, %v1006
  %v1008 = vpop.f32.mrf.mxu0
  %v1009 = vadd.f32 0.0, %v1008
  %v1010 = vpop.f32.mrf.mxu0
  %v1011 = vpop.f32.mrf.mxu0
  %1012 = vdwg.mxu0
  %s1013 = scalar_lea.vmem %s2, 5
  %v1014 = vld [vmem:[%s1013] ss:$8 sm:$0xf]
  %v1016 = vlaneseq
  %v1017 = vshrl.u32 %v1016, 7
  %v1018 = vsub.s32 0, %v1017
  %v1019 = vrot.slane %v1014, %v1018
  %v1020 = vlaneseq
  %v1021 = vshrl.u32 %v1020, 7
  %v1022 = vsub.s32 1, %v1021
  %v1023 = vrot.slane %v1014, %v1022
  %v1024 = vlaneseq
  %v1025 = vshrl.u32 %v1024, 7
  %v1026 = vsub.s32 2, %v1025
  %v1027 = vrot.slane %v1014, %v1026
  %v1028 = vlaneseq
  %v1029 = vshrl.u32 %v1028, 7
  %v1030 = vsub.s32 3, %v1029
  %v1031 = vrot.slane %v1014, %v1030
  %v1036 = vmul.f32 %v966, %v1019
  %v1037 = vmul.f32 %v968, %v1023
  %v1038 = vmul.f32 %v1007, %v1027
  %v1039 = vmul.f32 %v1009, %v1031
  %v1040 = vadd.f32 %v867, %v1036
  %v1041 = vadd.f32 %v868, %v1037
  %v1042 = vadd.f32 %v869, %v1038
  %v1043 = vadd.f32 %v870, %v1039
  %v1044 = vld [vmem:[#allocation2 + $0x2] sm:$0xff]
  %v1045 = vld [vmem:[#allocation2 + $0xa] sm:$0x3]
  %s1046 = scalar_lea.vmem %s1, 6
  %v1047 = vld [vmem:[%s1046] sm:$0x1]
  %v1050 = vcombine.high %v1044, %v1044
  %v1052 = vunpack.c.l.s4 1983009808
  %v1053 = vunpack.c.0.s8 %v1052
  %v1054 = vlaneseq
  %v1055 = vshrl.u32 %v1054, 7
  %v1056 = vsub.s32 %v1053, %v1055
  %v1057 = vrot.slane %v1044, %v1056
  %v1059 = vunpack.c.l.s4 1983009808
  %v1060 = vunpack.c.0.s8 %v1059
  %v1061 = vlaneseq
  %v1062 = vshrl.u32 %v1061, 7
  %v1063 = vsub.s32 %v1060, %v1062
  %v1064 = vrot.slane %v1050, %v1063
  %v1065 = vcombine.high %v1057, %v1057
  %v1066 = vcombine.high %v1064, %v1064
  %v1068 = vunpack.c.l.s4 1983009808
  %v1069 = vunpack.c.0.s8 %v1068
  %v1070 = vlaneseq
  %v1071 = vshrl.u32 %v1070, 7
  %v1072 = vsub.s32 %v1069, %v1071
  %v1073 = vrot.slane %v1045, %v1072
  %1074 = vrot.lane.b32.xlu0 %v1057, 113
  %v1075 = vpop.permute.xlu0 %1074
  %1076 = vrot.lane.b32.xlu0 %v1065, 113
  %v1077 = vpop.permute.xlu0 %1076
  %1078 = vrot.lane.b32.xlu0 %v1064, 113
  %v1079 = vpop.permute.xlu0 %1078
  %1080 = vrot.lane.b32.xlu0 %v1066, 113
  %v1081 = vpop.permute.xlu0 %1080
  %1082 = vrot.lane.b32.xlu0 %v1073, 113
  %v1083 = vpop.permute.xlu0 %1082
  %vm1084 = vcmask 924672
  %v1085 = vsel %vm1084, %v1075, %v1077
  %v1086 = vsel %vm1084, %v1077, %v1079
  %v1087 = vsel %vm1084, %v1079, %v1081
  %v1088 = vsel %vm1084, %v1081, %v1083
  %v1090 = vsel %vm101, %v1047, 0
  %v1093 = vsel %vm105, %v1085, 0
  %v1096 = vsel %vm105, %v1086, 0
  %v1099 = vsel %vm105, %v1087, 0
  %v1102 = vsel %vm105, %v1088, 0
  %1104 = vmatprep.subr.bf16.mxu0 0
  %1105 = vmatpush1.bf16.msra.mxu0 0
  %1106 = vmatprep.subr.bf16.mxu0 0
  %1107 = vmatpush1.bf16.msra.mxu0 0
  %1108 = vmatprep.subr.bf16.mxu0 0
  %1109 = vmatpush1.bf16.msra.mxu0 0
  %1110 = vmatprep.subr.bf16.mxu0 0
  %1111 = vmatpush1.bf16.msra.mxu0 0
  %1112 = vmatprep.subr.bf16.mxu0 0
  %1113 = vmatpush1.bf16.msra.mxu0 0
  %1114 = vmatprep.subr.bf16.mxu0 0
  %1115 = vmatpush1.bf16.msra.mxu0 0
  %1116 = vmatprep.subr.bf16.mxu0 0
  %1117 = vmatpush1.bf16.msra.mxu0 0
  %1118 = vmatprep.subr.bf16.mxu0 %v1096
  %1119 = vmatpush1.bf16.msra.mxu0 %v1093
  %1120 = vmatprep.subr.bf16.mxu0 0
  %1121 = vmatpush2.bf16.msra.mxu0 0
  %1122 = vmatprep.subr.bf16.mxu0 0
  %1123 = vmatpush2.bf16.msra.mxu0 0
  %1124 = vmatprep.subr.bf16.mxu0 0
  %1125 = vmatpush2.bf16.msra.mxu0 0
  %1126 = vmatprep.subr.bf16.mxu0 0
  %1127 = vmatpush2.bf16.msra.mxu0 0
  %1128 = vmatprep.subr.bf16.mxu0 0
  %1129 = vmatpush2.bf16.msra.mxu0 0
  %1130 = vmatprep.subr.bf16.mxu0 0
  %1131 = vmatpush2.bf16.msra.mxu0 0
  %1132 = vmatprep.subr.bf16.mxu0 0
  %1133 = vmatpush2.bf16.msra.mxu0 0
  %1134 = vmatprep.subr.bf16.mxu0 0
  %1135 = vmatpush2.bf16.msra.mxu0 0
  %1136 = vmatprep.mubr.bf16.mxu0 0
  %1137 = vmatmul.mubr.bf16.gmra.mxu0 %v1090
  %v1138 = vpop.f32.mrf.mxu0
  %v1139 = vadd.f32 0.0, %v1138
  %v1140 = vpop.f32.mrf.mxu0
  %v1141 = vadd.f32 0.0, %v1140
  %v1142 = vpop.f32.mrf.mxu0
  %v1143 = vpop.f32.mrf.mxu0
  %1144 = vdwg.mxu0
  %1145 = vmatprep.subr.bf16.mxu0 0
  %1146 = vmatpush1.bf16.msra.mxu0 0
  %1147 = vmatprep.subr.bf16.mxu0 0
  %1148 = vmatpush1.bf16.msra.mxu0 0
  %1149 = vmatprep.subr.bf16.mxu0 0
  %1150 = vmatpush1.bf16.msra.mxu0 0
  %1151 = vmatprep.subr.bf16.mxu0 0
  %1152 = vmatpush1.bf16.msra.mxu0 0
  %1153 = vmatprep.subr.bf16.mxu0 0
  %1154 = vmatpush1.bf16.msra.mxu0 0
  %1155 = vmatprep.subr.bf16.mxu0 0
  %1156 = vmatpush1.bf16.msra.mxu0 0
  %1157 = vmatprep.subr.bf16.mxu0 0
  %1158 = vmatpush1.bf16.msra.mxu0 0
  %1159 = vmatprep.subr.bf16.mxu0 %v1102
  %1160 = vmatpush1.bf16.msra.mxu0 %v1099
  %1161 = vmatprep.subr.bf16.mxu0 0
  %1162 = vmatpush2.bf16.msra.mxu0 0
  %1163 = vmatprep.subr.bf16.mxu0 0
  %1164 = vmatpush2.bf16.msra.mxu0 0
  %1165 = vmatprep.subr.bf16.mxu0 0
  %1166 = vmatpush2.bf16.msra.mxu0 0
  %1167 = vmatprep.subr.bf16.mxu0 0
  %1168 = vmatpush2.bf16.msra.mxu0 0
  %1169 = vmatprep.subr.bf16.mxu0 0
  %1170 = vmatpush2.bf16.msra.mxu0 0
  %1171 = vmatprep.subr.bf16.mxu0 0
  %1172 = vmatpush2.bf16.msra.mxu0 0
  %1173 = vmatprep.subr.bf16.mxu0 0
  %1174 = vmatpush2.bf16.msra.mxu0 0
  %1175 = vmatprep.subr.bf16.mxu0 0
  %1176 = vmatpush2.bf16.msra.mxu0 0
  %1177 = vmatprep.mubr.bf16.mxu0 0
  %1178 = vmatmul.mubr.bf16.gmra.mxu0 %v1090
  %v1179 = vpop.f32.mrf.mxu0
  %v1180 = vadd.f32 0.0, %v1179
  %v1181 = vpop.f32.mrf.mxu0
  %v1182 = vadd.f32 0.0, %v1181
  %v1183 = vpop.f32.mrf.mxu0
  %v1184 = vpop.f32.mrf.mxu0
  %1185 = vdwg.mxu0
  %s1186 = scalar_lea.vmem %s2, 6
  %v1187 = vld [vmem:[%s1186] ss:$8 sm:$0xf]
  %v1189 = vlaneseq
  %v1190 = vshrl.u32 %v1189, 7
  %v1191 = vsub.s32 0, %v1190
  %v1192 = vrot.slane %v1187, %v1191
  %v1193 = vlaneseq
  %v1194 = vshrl.u32 %v1193, 7
  %v1195 = vsub.s32 1, %v1194
  %v1196 = vrot.slane %v1187, %v1195
  %v1197 = vlaneseq
  %v1198 = vshrl.u32 %v1197, 7
  %v1199 = vsub.s32 2, %v1198
  %v1200 = vrot.slane %v1187, %v1199
  %v1201 = vlaneseq
  %v1202 = vshrl.u32 %v1201, 7
  %v1203 = vsub.s32 3, %v1202
  %v1204 = vrot.slane %v1187, %v1203
  %v1209 = vmul.f32 %v1139, %v1192
  %v1210 = vmul.f32 %v1141, %v1196
  %v1211 = vmul.f32 %v1180, %v1200
  %v1212 = vmul.f32 %v1182, %v1204
  %v1213 = vadd.f32 %v1040, %v1209
  %v1214 = vadd.f32 %v1041, %v1210
  %v1215 = vadd.f32 %v1042, %v1211
  %v1216 = vadd.f32 %v1043, %v1212
  %v1217 = vld [vmem:[#allocation2 + $0x2] sm:$0xff]
  %v1218 = vld [vmem:[#allocation2 + $0xa] sm:$0x3]
  %s1219 = scalar_lea.vmem %s1, 7
  %v1220 = vld [vmem:[%s1219] sm:$0x1]
  %v1223 = vcombine.high %v1217, %v1217
  %v1225 = vunpack.c.l.s4 1983009808
  %v1226 = vunpack.c.0.s8 %v1225
  %v1227 = vlaneseq
  %v1228 = vshrl.u32 %v1227, 7
  %v1229 = vsub.s32 %v1226, %v1228
  %v1230 = vrot.slane %v1217, %v1229
  %v1232 = vunpack.c.l.s4 1983009808
  %v1233 = vunpack.c.0.s8 %v1232
  %v1234 = vlaneseq
  %v1235 = vshrl.u32 %v1234, 7
  %v1236 = vsub.s32 %v1233, %v1235
  %v1237 = vrot.slane %v1223, %v1236
  %v1238 = vcombine.high %v1230, %v1230
  %v1239 = vcombine.high %v1237, %v1237
  %v1241 = vunpack.c.l.s4 1983009808
  %v1242 = vunpack.c.0.s8 %v1241
  %v1243 = vlaneseq
  %v1244 = vshrl.u32 %v1243, 7
  %v1245 = vsub.s32 %v1242, %v1244
  %v1246 = vrot.slane %v1218, %v1245
  %1247 = vrot.lane.b32.xlu0 %v1230, 112
  %v1248 = vpop.permute.xlu0 %1247
  %1249 = vrot.lane.b32.xlu0 %v1238, 112
  %v1250 = vpop.permute.xlu0 %1249
  %1251 = vrot.lane.b32.xlu0 %v1237, 112
  %v1252 = vpop.permute.xlu0 %1251
  %1253 = vrot.lane.b32.xlu0 %v1239, 112
  %v1254 = vpop.permute.xlu0 %1253
  %1255 = vrot.lane.b32.xlu0 %v1246, 112
  %v1256 = vpop.permute.xlu0 %1255
  %vm1257 = vcmask 916480
  %v1258 = vsel %vm1257, %v1248, %v1250
  %v1259 = vsel %vm1257, %v1250, %v1252
  %v1260 = vsel %vm1257, %v1252, %v1254
  %v1261 = vsel %vm1257, %v1254, %v1256
  %v1263 = vsel %vm101, %v1220, 0
  %v1266 = vsel %vm105, %v1258, 0
  %v1269 = vsel %vm105, %v1259, 0
  %v1272 = vsel %vm105, %v1260, 0
  %v1275 = vsel %vm105, %v1261, 0
  %1277 = vmatprep.subr.bf16.mxu0 0
  %1278 = vmatpush1.bf16.msra.mxu0 0
  %1279 = vmatprep.subr.bf16.mxu0 0
  %1280 = vmatpush1.bf16.msra.mxu0 0
  %1281 = vmatprep.subr.bf16.mxu0 0
  %1282 = vmatpush1.bf16.msra.mxu0 0
  %1283 = vmatprep.subr.bf16.mxu0 0
  %1284 = vmatpush1.bf16.msra.mxu0 0
  %1285 = vmatprep.subr.bf16.mxu0 0
  %1286 = vmatpush1.bf16.msra.mxu0 0
  %1287 = vmatprep.subr.bf16.mxu0 0
  %1288 = vmatpush1.bf16.msra.mxu0 0
  %1289 = vmatprep.subr.bf16.mxu0 0
  %1290 = vmatpush1.bf16.msra.mxu0 0
  %1291 = vmatprep.subr.bf16.mxu0 %v1269
  %1292 = vmatpush1.bf16.msra.mxu0 %v1266
  %1293 = vmatprep.subr.bf16.mxu0 0
  %1294 = vmatpush2.bf16.msra.mxu0 0
  %1295 = vmatprep.subr.bf16.mxu0 0
  %1296 = vmatpush2.bf16.msra.mxu0 0
  %1297 = vmatprep.subr.bf16.mxu0 0
  %1298 = vmatpush2.bf16.msra.mxu0 0
  %1299 = vmatprep.subr.bf16.mxu0 0
  %1300 = vmatpush2.bf16.msra.mxu0 0
  %1301 = vmatprep.subr.bf16.mxu0 0
  %1302 = vmatpush2.bf16.msra.mxu0 0
  %1303 = vmatprep.subr.bf16.mxu0 0
  %1304 = vmatpush2.bf16.msra.mxu0 0
  %1305 = vmatprep.subr.bf16.mxu0 0
  %1306 = vmatpush2.bf16.msra.mxu0 0
  %1307 = vmatprep.subr.bf16.mxu0 0
  %1308 = vmatpush2.bf16.msra.mxu0 0
  %1309 = vmatprep.mubr.bf16.mxu0 0
  %1310 = vmatmul.mubr.bf16.gmra.mxu0 %v1263
  %v1311 = vpop.f32.mrf.mxu0
  %v1312 = vadd.f32 0.0, %v1311
  %v1313 = vpop.f32.mrf.mxu0
  %v1314 = vadd.f32 0.0, %v1313
  %v1315 = vpop.f32.mrf.mxu0
  %v1316 = vpop.f32.mrf.mxu0
  %1317 = vdwg.mxu0
  %1318 = vmatprep.subr.bf16.mxu0 0
  %1319 = vmatpush1.bf16.msra.mxu0 0
  %1320 = vmatprep.subr.bf16.mxu0 0
  %1321 = vmatpush1.bf16.msra.mxu0 0
  %1322 = vmatprep.subr.bf16.mxu0 0
  %1323 = vmatpush1.bf16.msra.mxu0 0
  %1324 = vmatprep.subr.bf16.mxu0 0
  %1325 = vmatpush1.bf16.msra.mxu0 0
  %1326 = vmatprep.subr.bf16.mxu0 0
  %1327 = vmatpush1.bf16.msra.mxu0 0
  %1328 = vmatprep.subr.bf16.mxu0 0
  %1329 = vmatpush1.bf16.msra.mxu0 0
  %1330 = vmatprep.subr.bf16.mxu0 0
  %1331 = vmatpush1.bf16.msra.mxu0 0
  %1332 = vmatprep.subr.bf16.mxu0 %v1275
  %1333 = vmatpush1.bf16.msra.mxu0 %v1272
  %1334 = vmatprep.subr.bf16.mxu0 0
  %1335 = vmatpush2.bf16.msra.mxu0 0
  %1336 = vmatprep.subr.bf16.mxu0 0
  %1337 = vmatpush2.bf16.msra.mxu0 0
  %1338 = vmatprep.subr.bf16.mxu0 0
  %1339 = vmatpush2.bf16.msra.mxu0 0
  %1340 = vmatprep.subr.bf16.mxu0 0
  %1341 = vmatpush2.bf16.msra.mxu0 0
  %1342 = vmatprep.subr.bf16.mxu0 0
  %1343 = vmatpush2.bf16.msra.mxu0 0
  %1344 = vmatprep.subr.bf16.mxu0 0
  %1345 = vmatpush2.bf16.msra.mxu0 0
  %1346 = vmatprep.subr.bf16.mxu0 0
  %1347 = vmatpush2.bf16.msra.mxu0 0
  %1348 = vmatprep.subr.bf16.mxu0 0
  %1349 = vmatpush2.bf16.msra.mxu0 0
  %1350 = vmatprep.mubr.bf16.mxu0 0
  %1351 = vmatmul.mubr.bf16.gmra.mxu0 %v1263
  %v1352 = vpop.f32.mrf.mxu0
  %v1353 = vadd.f32 0.0, %v1352
  %v1354 = vpop.f32.mrf.mxu0
  %v1355 = vadd.f32 0.0, %v1354
  %v1356 = vpop.f32.mrf.mxu0
  %v1357 = vpop.f32.mrf.mxu0
  %1358 = vdwg.mxu0
  %s1359 = scalar_lea.vmem %s2, 7
  %v1360 = vld [vmem:[%s1359] ss:$8 sm:$0xf]
  %v1362 = vlaneseq
  %v1363 = vshrl.u32 %v1362, 7
  %v1364 = vsub.s32 0, %v1363
  %v1365 = vrot.slane %v1360, %v1364
  %v1366 = vlaneseq
  %v1367 = vshrl.u32 %v1366, 7
  %v1368 = vsub.s32 1, %v1367
  %v1369 = vrot.slane %v1360, %v1368
  %v1370 = vlaneseq
  %v1371 = vshrl.u32 %v1370, 7
  %v1372 = vsub.s32 2, %v1371
  %v1373 = vrot.slane %v1360, %v1372
  %v1374 = vlaneseq
  %v1375 = vshrl.u32 %v1374, 7
  %v1376 = vsub.s32 3, %v1375
  %v1377 = vrot.slane %v1360, %v1376
  %v1382 = vmul.f32 %v1312, %v1365
  %v1383 = vmul.f32 %v1314, %v1369
  %v1384 = vmul.f32 %v1353, %v1373
  %v1385 = vmul.f32 %v1355, %v1377
  %v1386 = vadd.f32 %v1213, %v1382
  %v1387 = vadd.f32 %v1214, %v1383
  %v1388 = vadd.f32 %v1215, %v1384
  %v1389 = vadd.f32 %v1216, %v1385
  %v1390 = vld [vmem:[#allocation2 + $0x2] sm:$0xff]
  %v1391 = vld [vmem:[#allocation2 + $0xa] sm:$0x3]
  %s1392 = scalar_lea.vmem %s1, 8
  %v1393 = vld [vmem:[%s1392] sm:$0x1]
  %v1396 = vcombine.high %v1390, %v1390
  %v1398 = vunpack.c.l.s4 1983009808
  %v1399 = vunpack.c.0.s8 %v1398
  %v1400 = vlaneseq
  %v1401 = vshrl.u32 %v1400, 7
  %v1402 = vsub.s32 %v1399, %v1401
  %v1403 = vrot.slane %v1390, %v1402
  %v1405 = vunpack.c.l.s4 1983009808
  %v1406 = vunpack.c.0.s8 %v1405
  %v1407 = vlaneseq
  %v1408 = vshrl.u32 %v1407, 7
  %v1409 = vsub.s32 %v1406, %v1408
  %v1410 = vrot.slane %v1396, %v1409
  %v1411 = vcombine.high %v1403, %v1403
  %v1412 = vcombine.high %v1410, %v1410
  %v1414 = vunpack.c.l.s4 1983009808
  %v1415 = vunpack.c.0.s8 %v1414
  %v1416 = vlaneseq
  %v1417 = vshrl.u32 %v1416, 7
  %v1418 = vsub.s32 %v1415, %v1417
  %v1419 = vrot.slane %v1391, %v1418
  %1420 = vrot.lane.b32.xlu0 %v1403, 111
  %v1421 = vpop.permute.xlu0 %1420
  %1422 = vrot.lane.b32.xlu0 %v1411, 111
  %v1423 = vpop.permute.xlu0 %1422
  %1424 = vrot.lane.b32.xlu0 %v1410, 111
  %v1425 = vpop.permute.xlu0 %1424
  %1426 = vrot.lane.b32.xlu0 %v1412, 111
  %v1427 = vpop.permute.xlu0 %1426
  %1428 = vrot.lane.b32.xlu0 %v1419, 111
  %v1429 = vpop.permute.xlu0 %1428
  %vm1430 = vcmask 908288
  %v1431 = vsel %vm1430, %v1421, %v1423
  %v1432 = vsel %vm1430, %v1423, %v1425
  %v1433 = vsel %vm1430, %v1425, %v1427
  %v1434 = vsel %vm1430, %v1427, %v1429
  %v1436 = vsel %vm101, %v1393, 0
  %v1439 = vsel %vm105, %v1431, 0
  %v1442 = vsel %vm105, %v1432, 0
  %v1445 = vsel %vm105, %v1433, 0
  %v1448 = vsel %vm105, %v1434, 0
  %1450 = vmatprep.subr.bf16.mxu0 0
  %1451 = vmatpush1.bf16.msra.mxu0 0
  %1452 = vmatprep.subr.bf16.mxu0 0
  %1453 = vmatpush1.bf16.msra.mxu0 0
  %1454 = vmatprep.subr.bf16.mxu0 0
  %1455 = vmatpush1.bf16.msra.mxu0 0
  %1456 = vmatprep.subr.bf16.mxu0 0
  %1457 = vmatpush1.bf16.msra.mxu0 0
  %1458 = vmatprep.subr.bf16.mxu0 0
  %1459 = vmatpush1.bf16.msra.mxu0 0
  %1460 = vmatprep.subr.bf16.mxu0 0
  %1461 = vmatpush1.bf16.msra.mxu0 0
  %1462 = vmatprep.subr.bf16.mxu0 0
  %1463 = vmatpush1.bf16.msra.mxu0 0
  %1464 = vmatprep.subr.bf16.mxu0 %v1442
  %1465 = vmatpush1.bf16.msra.mxu0 %v1439
  %1466 = vmatprep.subr.bf16.mxu0 0
  %1467 = vmatpush2.bf16.msra.mxu0 0
  %1468 = vmatprep.subr.bf16.mxu0 0
  %1469 = vmatpush2.bf16.msra.mxu0 0
  %1470 = vmatprep.subr.bf16.mxu0 0
  %1471 = vmatpush2.bf16.msra.mxu0 0
  %1472 = vmatprep.subr.bf16.mxu0 0
  %1473 = vmatpush2.bf16.msra.mxu0 0
  %1474 = vmatprep.subr.bf16.mxu0 0
  %1475 = vmatpush2.bf16.msra.mxu0 0
  %1476 = vmatprep.subr.bf16.mxu0 0
  %1477 = vmatpush2.bf16.msra.mxu0 0
  %1478 = vmatprep.subr.bf16.mxu0 0
  %1479 = vmatpush2.bf16.msra.mxu0 0
  %1480 = vmatprep.subr.bf16.mxu0 0
  %1481 = vmatpush2.bf16.msra.mxu0 0
  %1482 = vmatprep.mubr.bf16.mxu0 0
  %1483 = vmatmul.mubr.bf16.gmra.mxu0 %v1436
  %v1484 = vpop.f32.mrf.mxu0
  %v1485 = vadd.f32 0.0, %v1484
  %v1486 = vpop.f32.mrf.mxu0
  %v1487 = vadd.f32 0.0, %v1486
  %v1488 = vpop.f32.mrf.mxu0
  %v1489 = vpop.f32.mrf.mxu0
  %1490 = vdwg.mxu0
  %1491 = vmatprep.subr.bf16.mxu0 0
  %1492 = vmatpush1.bf16.msra.mxu0 0
  %1493 = vmatprep.subr.bf16.mxu0 0
  %1494 = vmatpush1.bf16.msra.mxu0 0
  %1495 = vmatprep.subr.bf16.mxu0 0
  %1496 = vmatpush1.bf16.msra.mxu0 0
  %1497 = vmatprep.subr.bf16.mxu0 0
  %1498 = vmatpush1.bf16.msra.mxu0 0
  %1499 = vmatprep.subr.bf16.mxu0 0
  %1500 = vmatpush1.bf16.msra.mxu0 0
  %1501 = vmatprep.subr.bf16.mxu0 0
  %1502 = vmatpush1.bf16.msra.mxu0 0
  %1503 = vmatprep.subr.bf16.mxu0 0
  %1504 = vmatpush1.bf16.msra.mxu0 0
  %1505 = vmatprep.subr.bf16.mxu0 %v1448
  %1506 = vmatpush1.bf16.msra.mxu0 %v1445
  %1507 = vmatprep.subr.bf16.mxu0 0
  %1508 = vmatpush2.bf16.msra.mxu0 0
  %1509 = vmatprep.subr.bf16.mxu0 0
  %1510 = vmatpush2.bf16.msra.mxu0 0
  %1511 = vmatprep.subr.bf16.mxu0 0
  %1512 = vmatpush2.bf16.msra.mxu0 0
  %1513 = vmatprep.subr.bf16.mxu0 0
  %1514 = vmatpush2.bf16.msra.mxu0 0
  %1515 = vmatprep.subr.bf16.mxu0 0
  %1516 = vmatpush2.bf16.msra.mxu0 0
  %1517 = vmatprep.subr.bf16.mxu0 0
  %1518 = vmatpush2.bf16.msra.mxu0 0
  %1519 = vmatprep.subr.bf16.mxu0 0
  %1520 = vmatpush2.bf16.msra.mxu0 0
  %1521 = vmatprep.subr.bf16.mxu0 0
  %1522 = vmatpush2.bf16.msra.mxu0 0
  %1523 = vmatprep.mubr.bf16.mxu0 0
  %1524 = vmatmul.mubr.bf16.gmra.mxu0 %v1436
  %v1525 = vpop.f32.mrf.mxu0
  %v1526 = vadd.f32 0.0, %v1525
  %v1527 = vpop.f32.mrf.mxu0
  %v1528 = vadd.f32 0.0, %v1527
  %v1529 = vpop.f32.mrf.mxu0
  %v1530 = vpop.f32.mrf.mxu0
  %1531 = vdwg.mxu0
  %s1532 = scalar_lea.vmem %s2, 32
  %v1533 = vld [vmem:[%s1532] ss:$8 sm:$0xf]
  %v1535 = vlaneseq
  %v1536 = vshrl.u32 %v1535, 7
  %v1537 = vsub.s32 0, %v1536
  %v1538 = vrot.slane %v1533, %v1537
  %v1539 = vlaneseq
  %v1540 = vshrl.u32 %v1539, 7
  %v1541 = vsub.s32 1, %v1540
  %v1542 = vrot.slane %v1533, %v1541
  %v1543 = vlaneseq
  %v1544 = vshrl.u32 %v1543, 7
  %v1545 = vsub.s32 2, %v1544
  %v1546 = vrot.slane %v1533, %v1545
  %v1547 = vlaneseq
  %v1548 = vshrl.u32 %v1547, 7
  %v1549 = vsub.s32 3, %v1548
  %v1550 = vrot.slane %v1533, %v1549
  %v1555 = vmul.f32 %v1485, %v1538
  %v1556 = vmul.f32 %v1487, %v1542
  %v1557 = vmul.f32 %v1526, %v1546
  %v1558 = vmul.f32 %v1528, %v1550
  %v1559 = vadd.f32 %v1386, %v1555
  %v1560 = vadd.f32 %v1387, %v1556
  %v1561 = vadd.f32 %v1388, %v1557
  %v1562 = vadd.f32 %v1389, %v1558
  %v1563 = vsel %vm105, %v1559, 0.0
  %v1564 = vsel %vm105, %v1560, 0.0
  %v1565 = vadd.f32 %v1563, %v1564
  %v1566 = vsel %vm105, %v1561, 0.0
  %v1567 = vadd.f32 %v1565, %v1566
  %v1568 = vsel %vm105, %v1562, 0.0
  %v1569 = vadd.f32 %v1567, %v1568
  %1570 = vadd.xlane.f32.xlu0 %v1569
  %v1571 = vpop.xlane.xlu0 %1570
  %v1572 = vmul.f32 %v1571, 0.001953125
  %v1573 = vsub.f32 %v1559, %v1572
  %v1574 = vsub.f32 %v1560, %v1572
  %v1575 = vsub.f32 %v1561, %v1572
  %v1576 = vsub.f32 %v1562, %v1572
  %v1577 = vmul.f32 %v1573, %v1573
  %v1578 = vmul.f32 %v1574, %v1574
  %v1579 = vmul.f32 %v1575, %v1575
  %v1580 = vmul.f32 %v1576, %v1576
  %v1581 = vsel %vm105, %v1577, 0.0
  %v1582 = vsel %vm105, %v1578, 0.0
  %v1583 = vadd.f32 %v1581, %v1582
  %v1584 = vsel %vm105, %v1579, 0.0
  %v1585 = vadd.f32 %v1583, %v1584
  %v1586 = vsel %vm105, %v1580, 0.0
  %v1587 = vadd.f32 %v1585, %v1586
  %1588 = vadd.xlane.f32.xlu0 %v1587
  %v1589 = vpop.xlane.xlu0 %1588
  %v1590 = vmul.f32 %v1589, 0.001953125
  %v1591 = vld [vmem:[%s3] sm:$0x3]
  %v1592 = vadd.f32 %v1590, 1e-05
  %v1593 = vrsqrt.pop %v1592
  %v1594 = vmul.f32 %v1591, %v1593
  %1596 = vset.pattern.permute.xlu0 0
  %1597 = vperm.xlu0 %1596, %v1594
  %v1598 = vpop.permute.xlu0 %1597
  %v1600 = vmul.f32 %v1573, %v1598
  %v1601 = vmul.f32 %v1574, %v1598
  %v1602 = vmul.f32 %v1575, %v1598
  %v1603 = vmul.f32 %v1576, %v1598
  %1605 = vset.pattern.permute.xlu0 1
  %1606 = vperm.xlu0 %1605, %v1591
  %v1607 = vpop.permute.xlu0 %1606
  %v1609 = vadd.f32 %v1600, %v1607
  %v1610 = vadd.f32 %v1601, %v1607
  %v1611 = vadd.f32 %v1602, %v1607
  %v1612 = vadd.f32 %v1603, %v1607
  %v1613 = vmax.f32 %v1609, 0.0
  %v1614 = vmax.f32 %v1610, 0.0
  %v1615 = vmax.f32 %v1611, 0.0
  %v1616 = vmax.f32 %v1612, 0.0
  %v1619 = vcombine.low %v1613, %v1614
  %v1621 = vunpack.c.l.s4 1983009808
  %v1622 = vunpack.c.0.s8 %v1621
  %v1623 = vlaneseq
  %v1624 = vshrl.u32 %v1623, 7
  %v1625 = vsub.s32 %v1622, %v1624
  %v1626 = vrot.slane %v1619, %v1625
  %1628 = vst [vmem:[%s4] sm:$0xf] %v1626
  %v1631 = vcombine.low %v1615, %v1616
  %v1633 = vunpack.c.l.s4 1983009808
  %v1634 = vunpack.c.0.s8 %v1633
  %v1635 = vlaneseq
  %v1636 = vshrl.u32 %v1635, 7
  %v1637 = vsub.s32 %v1634, %v1636
  %v1638 = vrot.slane %v1631, %v1637
  %s1640 = scalar_lea.vmem %s4, 4
  %1641 = vst [vmem:[%s1640] sm:$0xf] %v1638
  // Predicated region
  $region18: #{xzh_pingxing_forward.1} parent=0 // pred_check
    _
  $region19: #{xzh_pingxing_forward.1} parent=0 // pred_check_branch
    %1643 = sbr.rel (0) target = $region21
  $region20: #{xzh_pingxing_forward.1} parent=0 // pred_region
    _
  $region21: #{xzh_pingxing_forward.1} parent=0 // pred_fallthru
    _
  // Predicated region
  $region22: #{xzh_pingxing_forward.1} parent=0 // pred_check
    _
  $region23: #{xzh_pingxing_forward.1} parent=0 // pred_check_branch
    %1645 = sbr.rel (0) target = $region25
  $region24: #{xzh_pingxing_forward.1} parent=0 // pred_region
    _
  $region25: #{xzh_pingxing_forward.1} parent=0 // pred_fallthru
    _

</llo_original>
